<compile_context>
chip_gen: v5e
topology: v5e:2x2
jax: 0.10.0
libtpu: 0.0.40
codegen_flags: <defaults>
</compile_context>

<pallas_src>
import math
import numpy as np
import jax
import jax.numpy as jnp
from jax.experimental import pallas as pl
from jax.experimental.pallas import tpu as pltpu


def _round_up(n, m):
    return ((n + m - 1) // m) * m


def _hw_config():
    """Per-generation (matmul dtype, matmul accum dtype, scoped-VMEM budget)."""
    try:
        kind = jax.devices()[0].device_kind.lower()
    except Exception:
        kind = ""
    fp8 = getattr(jnp, "float8_e4m3fn", None)
    if ("v7" in kind or "7x" in kind) and fp8 is not None:
        # v7x: fp8 MXU path (no integer MXU); only 64 MiB VMEM per TensorCore.
        return fp8, jnp.float32, 44 << 20
    if ("v5" in kind) or ("v6" in kind):
        # v5e/v5p/v6e: native int8 MXU path; 128 MiB VMEM.
        return jnp.int8, jnp.int32, 96 << 20
    # Older / unknown hardware: bf16 is the portable lossless choice.
    return jnp.bfloat16, jnp.float32, 64 << 20


def _make_kernel(B, Q_pad, quantize, acc_dtype):
    m_rows = B * Q_pad

    def kernel(mask_ref, id_ref, lvl_ref, *rest):
        if quantize:
            rand_ref, out_ref = rest
        else:
            (out_ref,) = rest
        td = out_ref.shape[-1]

        # One MXU matmul per D tile: (m_pad, dim_in) @ (dim_in, td).
        # Row b*Q_pad + q of the LHS is the one-hot mask (idx[b, :] == q);
        # padded rows are all-zero.
        s = jnp.dot(mask_ref[...], id_ref[...],
                    preferred_element_type=acc_dtype)          # (m_pad, td)

        # Aligned epilogue: one VPU multiply + one sublane (XLU) reduction.
        # m_rows and Q_pad are multiples of 8, so the slice and reshape are
        # pure re-tilings (no relayout, no masked selects).
        s = s[:m_rows, :].astype(jnp.float32).reshape(B, Q_pad, td)
        lvl = lvl_ref[...].astype(jnp.float32)                 # (Q_pad, td)
        acc = jnp.sum(s * lvl[None, :, :], axis=1)             # (B, td) f32

        if quantize:
            acc = jnp.clip(acc, -1.0, 1.0)
            # Accumulated values are exact small integers in f32 (id/lvl are
            # exactly +/-1), so == 0.0 mirrors torch's `encoded == 0`.
            acc = jnp.where(acc == 0.0, rand_ref[...].astype(jnp.float32), acc)

        out_ref[...] = acc

    return kernel


def id_level_encode(x, intervals, id_hvs, lvl_hvs, rand_pm1=None, *,
                    minval, maxval, qbins, quantize=True, tile_d=None,
                    mm_dtype=None):
    B = x.shape[0]
    x_flat = x.reshape(B, -1).astype(jnp.float32)              # nn.Flatten
    dim_in, D = id_hvs.shape
    assert x_flat.shape[1] == dim_in
    Q = qbins + 1
    assert lvl_hvs.shape == (Q, D)
    # TODO(synk): pad dim_in / D here if callers ever pass non-128-multiples.
    assert dim_in % 128 == 0 and D % 128 == 0

    mm_dt, acc_dt, vmem_budget = _hw_config()
    if mm_dtype is not None:
        mm_dt = mm_dtype
        acc_dt = jnp.int32 if jnp.issubdtype(mm_dt, jnp.integer) else jnp.float32
    mm_bytes = jnp.dtype(mm_dt).itemsize

    # Batch-major stacking: row = b * Q_pad + q.  Q_pad multiple of 8 keeps
    # the in-kernel slice/reshape sublane-aligned; m_pad multiple of 32
    # satisfies the packed-dtype (int8/fp8) sublane tiling of the MXU LHS.
    Q_pad = _round_up(Q, 8)
    m_rows = B * Q_pad
    m_pad = _round_up(m_rows, 32)

    def vmem_est(td):
        est = 2 * m_pad * dim_in * mm_bytes          # mask (double-buffered)
        est += 2 * dim_in * td * mm_bytes            # id tile (double-buffered)
        est += 2 * Q_pad * td * 2                    # lvl tile (bf16)
        est += 2 * B * td * 4                        # out tile (f32)
        if quantize:
            est += 2 * B * td * 2                    # rand tile (bf16)
        est += m_pad * td * 4                        # matmul result + epilogue temps
        est += 4 << 20                               # compiler slack
        return est

    if tile_d is None:
        cands = [t for t in range(128, min(D, 2048) + 1, 128) if D % t == 0]
        fit = [t for t in cands if vmem_est(t) <= vmem_budget] or cands[:1]
        # >= 4 grid steps => real double-buffering of the id_hvs stream and
        # work for both TensorCores on v7x; among those take the largest tile.
        deep = [t for t in fit if D // t >= 4]
        tile_d = max(deep or fit)
    assert D % tile_d == 0 and tile_d % 128 == 0

    # ---- grid-invariant preprocessing, hoisted out of the Pallas grid ----
    x_clip = jnp.clip(x_flat, minval, maxval)
    idx = jnp.searchsorted(intervals.astype(jnp.float32), x_clip, side="left")

    onehot = (idx[:, None, :] ==
              jnp.arange(Q_pad, dtype=idx.dtype)[None, :, None])   # (B,Q_pad,dim_in)
    mask = onehot.reshape(m_rows, dim_in).astype(jnp.float32)
    mask = jnp.pad(mask, ((0, m_pad - m_rows), (0, 0))).astype(mm_dt)

    id_mm = id_hvs.astype(jnp.float32).astype(mm_dt)    # +/-1 exact in int8/fp8/bf16
    lvl_pad = jnp.zeros((Q_pad, D), jnp.bfloat16).at[:Q, :].set(
        lvl_hvs.astype(jnp.bfloat16))                   # +/-1 exact in bf16

    kernel = _make_kernel(B, Q_pad, quantize, acc_dt)
    grid = (D // tile_d,)

    in_specs = [
        # Grid-invariant stacked one-hot LHS (constant index_map -> DMA'd once).
        # TODO(synk): pipeline_mode=pl.Buffered(1) would also drop the redundant
        # second VMEM buffer for this constant block (matters only at large B).
        pl.BlockSpec((m_pad, dim_in), lambda j: (0, 0)),
        pl.BlockSpec((dim_in, tile_d), lambda j: (0, j)),   # id_hvs tile (narrow dtype)
        pl.BlockSpec((Q_pad, tile_d), lambda j: (0, j)),    # lvl_hvs tile (bf16)
    ]
    operands = [mask, id_mm, lvl_pad]
    if quantize:
        assert rand_pm1 is not None and rand_pm1.shape == (B, D)
        in_specs.append(pl.BlockSpec((B, tile_d), lambda j: (0, j)))
        operands.append(rand_pm1.astype(jnp.bfloat16))      # +/-1 exact

    vmem_limit = int(min(max(vmem_est(tile_d), 16 << 20), vmem_budget))

    out = pl.pallas_call(
        kernel,
        out_shape=jax.ShapeDtypeStruct((B, D), jnp.float32),
        grid=grid,
        in_specs=in_specs,
        out_specs=pl.BlockSpec((B, tile_d), lambda j: (0, j)),
        compiler_params=pltpu.CompilerParams(
            dimension_semantics=("parallel",),
            vmem_limit_bytes=vmem_limit),
    )(*operands)
    return out


def reference(x, intervals, id_hvs, lvl_hvs, rand_pm1, minval, maxval,
              quantize=True):
    B = x.shape[0]
    xf = np.clip(np.asarray(x).reshape(B, -1), minval, maxval)
    idx = np.searchsorted(np.asarray(intervals), xf, side="left")
    enc = (np.asarray(lvl_hvs)[idx] * np.asarray(id_hvs)[None]).sum(axis=1)
    if quantize:
        enc = np.clip(enc, -1.0, 1.0)
        enc = np.where(enc == 0.0, np.asarray(rand_pm1), enc)
    return enc.astype(np.float32)


if __name__ == "__main__":
    B, C, H, W = 2, 4, 16, 16
    dim_in = C * H * W          # 1024
    D = 2048                    # auto tile_d=512 -> grid=(4,)
    qbins = 16
    minval, maxval = 0.0, 1.0
    sparsity = 0.5

    key = jax.random.PRNGKey(0)
    kx, kid, krand = jax.random.split(key, 3)

    # input (exercise clamping by going slightly out of [minval, maxval])
    x = jax.random.uniform(kx, (B, C, H, W), dtype=jnp.float32,
                           minval=-0.1, maxval=1.1)

    # intervals = arange(minval, maxval, bin_len) -> qbins boundaries
    bin_len = (maxval - minval) / qbins
    intervals = (minval + bin_len * jnp.arange(qbins)).astype(jnp.float32)

    # id_hvs: 2*bernoulli(sparsity)-1, shape (dim_in, D)
    id_hvs = (2.0 * jax.random.bernoulli(kid, p=sparsity,
                                         shape=(dim_in, D)).astype(jnp.float32)
              - 1.0)

    # lvl_hvs: same construction as the torch module, deterministic numpy RNG
    rng = np.random.RandomState(0)
    temp = np.array([1] * int(D * sparsity) + [-1] * int(D * (1 - sparsity)),
                    dtype=np.float32)
    rng.shuffle(temp)
    lvl_list = [temp.copy()]
    change_list = np.arange(D)
    rng.shuffle(change_list)
    cnt_to_change = math.floor(D / 2 / qbins)
    for i in range(1, qbins + 1):
        t = lvl_list[i - 1].copy()
        sel = change_list[(i - 1) * cnt_to_change: i * cnt_to_change]
        t[sel] = -t[sel]
        lvl_list.append(t)
    lvl_hvs = jnp.asarray(np.stack(lvl_list), dtype=jnp.float32)  # (qbins+1, D)

    # random +/-1 used in forward() to break exact zeros (torch.bernoulli);
    # drawn once here so kernel and reference are deterministically identical.
    rand_pm1 = (2.0 * jax.random.bernoulli(krand, p=sparsity,
                                           shape=(B, D)).astype(jnp.float32)
                - 1.0)

    out = id_level_encode(x, intervals, id_hvs, lvl_hvs, rand_pm1,
                          minval=minval, maxval=maxval, qbins=qbins,
                          quantize=True)          # auto tile_d (deep grid)
    out = jax.block_until_ready(out)

    ref = reference(x, intervals, id_hvs, lvl_hvs, rand_pm1, minval, maxval,
                    quantize=True)
    np.testing.assert_allclose(np.asarray(out), ref, rtol=1e-5, atol=1e-5)
    print("KERNEL_OK")
</pallas_src>

<mosaic_0001>
module attributes {stable_mosaic.version = 11 : i64} {
  func.func @kernel(%arg0: i32, %arg1: memref<64x1024xbf16, #tpu.memory_space<vmem>>, %arg2: memref<1024x512xbf16, #tpu.memory_space<vmem>>, %arg3: memref<24x512xbf16, #tpu.memory_space<vmem>>, %arg4: memref<2x512xbf16, #tpu.memory_space<vmem>>, %arg5: memref<2x512xf32, #tpu.memory_space<vmem>>) attributes {dimension_semantics = [#tpu.dimension_semantics<parallel>], iteration_bounds = array<i64: 4>, scalar_prefetch = 0 : i64, scratch_operands = 0 : i64, tpu.core_type = #tpu.core_type<tc>, window_params = [{pipeline_mode = #tpu.pipeline_mode<synchronous>, transform_indices = @transform_0, window_bounds = array<i64: 64, 1024>}, {transform_indices = @transform_1, window_bounds = array<i64: 1024, 512>}, {transform_indices = @transform_2, window_bounds = array<i64: 24, 512>}, {transform_indices = @transform_3, window_bounds = array<i64: 2, 512>}, {transform_indices = @transform_4, window_bounds = array<i64: 2, 512>}]} {
    %c0 = arith.constant 0 : index
    %c0_0 = arith.constant 0 : index
    %0 = vector.load %arg1[%c0, %c0_0] : memref<64x1024xbf16, #tpu.memory_space<vmem>>, vector<64x1024xbf16>
    %c0_1 = arith.constant 0 : index
    %c0_2 = arith.constant 0 : index
    %1 = vector.load %arg2[%c0_1, %c0_2] : memref<1024x512xbf16, #tpu.memory_space<vmem>>, vector<1024x512xbf16>
    %cst = arith.constant dense<0.000000e+00> : vector<64x512xf32>
    %2 = tpu.matmul %0, %1, %cst {dimension_numbers = #tpu.dot_dimension_numbers<[1], [0], [0], [1], [0, 0, 1, 1], [], []>} : vector<64x1024xbf16>, vector<1024x512xbf16>, vector<64x512xf32> -> vector<64x512xf32>
    %3 = vector.extract_strided_slice %2 {offsets = [0, 0], sizes = [48, 512], strides = [1, 1]} : vector<64x512xf32> to vector<48x512xf32>
    %4 = vector.shape_cast %3 : vector<48x512xf32> to vector<2x24x512xf32>
    %c0_3 = arith.constant 0 : index
    %c0_4 = arith.constant 0 : index
    %5 = vector.load %arg3[%c0_3, %c0_4] : memref<24x512xbf16, #tpu.memory_space<vmem>>, vector<24x512xbf16>
    %6 = arith.extf %5 : vector<24x512xbf16> to vector<24x512xf32>
    %7 = vector.shape_cast %6 : vector<24x512xf32> to vector<1x24x512xf32>
    %8 = vector.broadcast %7 : vector<1x24x512xf32> to vector<2x24x512xf32>
    %9 = arith.mulf %4, %8 : vector<2x24x512xf32>
    %cst_5 = arith.constant dense<0.000000e+00> : vector<2x512xf32>
    %10 = vector.multi_reduction <add>, %9, %cst_5 [1] : vector<2x24x512xf32> to vector<2x512xf32>
    %cst_6 = arith.constant -1.000000e+00 : f32
    %cst_7 = arith.constant 1.000000e+00 : f32
    %11 = vector.broadcast %cst_6 : f32 to vector<2x512xf32>
    %12 = arith.maximumf %11, %10 : vector<2x512xf32>
    %13 = vector.broadcast %cst_7 : f32 to vector<2x512xf32>
    %14 = arith.minimumf %13, %12 : vector<2x512xf32>
    %cst_8 = arith.constant 0.000000e+00 : f32
    %15 = vector.broadcast %cst_8 : f32 to vector<2x512xf32>
    %16 = arith.cmpf oeq, %14, %15 : vector<2x512xf32>
    %c0_9 = arith.constant 0 : index
    %c0_10 = arith.constant 0 : index
    %17 = vector.load %arg4[%c0_9, %c0_10] : memref<2x512xbf16, #tpu.memory_space<vmem>>, vector<2x512xbf16>
    %18 = arith.extf %17 : vector<2x512xbf16> to vector<2x512xf32>
    %19 = arith.select %16, %18, %14 : vector<2x512xi1>, vector<2x512xf32>
    %c0_11 = arith.constant 0 : index
    %c0_12 = arith.constant 0 : index
    %20 = vector.load %arg5[%c0_11, %c0_12] : memref<2x512xf32, #tpu.memory_space<vmem>>, vector<2x512xf32>
    tpu.vector_store %arg5[%c0_11, %c0_12], %19 {strides = array<i32>} : memref<2x512xf32, #tpu.memory_space<vmem>>, vector<2x512xf32>,
    return
  }
  func.func @transform_0(%arg0: i32) -> (i32, i32) {
    %c0_i32 = arith.constant 0 : i32
    %c0_i32_0 = arith.constant 0 : i32
    %c0_i32_1 = arith.constant 0 : i32
    return %c0_i32, %c0_i32_0 : i32, i32
  }
  func.func @transform_1(%arg0: i32) -> (i32, i32) {
    %c0_i32 = arith.constant 0 : i32
    %c0_i32_0 = arith.constant 0 : i32
    return %c0_i32, %arg0 : i32, i32
  }
  func.func @transform_2(%arg0: i32) -> (i32, i32) {
    %c0_i32 = arith.constant 0 : i32
    %c0_i32_0 = arith.constant 0 : i32
    return %c0_i32, %arg0 : i32, i32
  }
  func.func @transform_3(%arg0: i32) -> (i32, i32) {
    %c0_i32 = arith.constant 0 : i32
    %c0_i32_0 = arith.constant 0 : i32
    return %c0_i32, %arg0 : i32, i32
  }
  func.func @transform_4(%arg0: i32) -> (i32, i32) {
    %c0_i32 = arith.constant 0 : i32
    %c0_i32_0 = arith.constant 0 : i32
    return %c0_i32, %arg0 : i32, i32
  }
}

</mosaic_0001>

<llo_original>
// kernel: tpu_custom_call.1
$region0: #{tpu_custom_call.1}
  #allocation0 [shape = 'u32[]', space=smem, size = 0x4, offset = 0x4, fixed_abs, tag = 'smem constant byte address 0x4 - core index']
  #allocation1 [shape = 'u32[72,128]{1,0:T(1,128)}', space=vmem, size = 0x9000, scoped, tag = 'internal scratch']
  %s0 = inlined_call_operand.hbm [shape: bf16[64,1024], index: 0, kind: input, shape index: {}]
  %s1 = inlined_call_operand.hbm [shape: bf16[1024,2048], index: 1, kind: input, shape index: {}]
  %s2 = inlined_call_operand.hbm [shape: bf16[24,2048], index: 2, kind: input, shape index: {}]
  %s3 = inlined_call_operand.hbm [shape: bf16[2,2048], index: 3, kind: input, shape index: {}]
  %s4 = inlined_call_operand.hbm [shape: f32[2,2048], index: 4, kind: output, shape index: {}]
  %s5 = sld [smem:[#allocation0]]
  $region65: #{tpu_custom_call.1} parent=0
    _
  %s7 = ssub.s32 1, %s5
  %s8 = scalar_select 0, %s7, %s5
  $region1: #{tpu_custom_call.1} parent=0
    #allocation2 [shape = 'u8[131072]{0}', space=vmem, size = 0x20000, scoped, tag = 'input window, operand 0, single buffered']
    #allocation3 [shape = 's32[2]{0}', space=sflag, size = 0x8, scoped, tag = 'scoped memory for tpu_custom_call.1']
    #allocation4 [shape = 's32[2]{0}', space=sflag, size = 0x8, scoped, tag = 'scoped memory for tpu_custom_call.1']
    #allocation5 [shape = 'u8[2097152]{0}', space=vmem, size = 0x200000, scoped, tag = 'input window, operand 1']
    #allocation6 [shape = 's32[2]{0}', space=sflag, size = 0x8, scoped, tag = 'scoped memory for tpu_custom_call.1']
    #allocation7 [shape = 'u8[49152]{0}', space=vmem, size = 0xc000, scoped, tag = 'input window, operand 2']
    #allocation8 [shape = 'u8[4096]{0}', space=vmem, size = 0x1000, scoped, tag = 'input window, operand 3']
    #allocation9 [shape = 's32[2]{0}', space=sflag, size = 0x8, scoped, tag = 'scoped memory for tpu_custom_call.1']
    #allocation10 [shape = 'u8[8192]{0}', space=vmem, size = 0x2000, scoped, tag = 'output window, operand 0']
    %9 = vsyncpa [#allocation3], 0
    %10 = vsyncpa [#allocation6], 0
    %s11 = scalar_lea.sflag [#allocation6], 1
    %12 = vsyncpa %s11, 0
    %13 = vsyncpa [#allocation9], 0
    %s14 = scalar_lea.sflag [#allocation9], 1
    %15 = vsyncpa %s14, 0
    %16 = vsyncpa [#allocation4], 0
    %s17 = scalar_lea.sflag [#allocation4], 1
    %18 = vsyncpa %s17, 0
    loop: start=0, step=1, limit=6
    $region2: #{tpu_custom_call.1} parent=1 // loop_pre_header
      _
    $region3: #{tpu_custom_call.1} parent=1 // loop_header
      %s20 = sphi 0, %s24
      %p21 = scmp.ge.s32.totalorder %s20, 6
      %s28 = sphi 0, %s28
      %s30 = sphi 0, %s28
      %s31 = sphi 0, %s30
      %s45 = sphi 0, %s31
      %s51 = sphi 0, %s53
      %s54 = sphi 0, %s51
      %s55 = sphi 0, %s54
      %s71 = sphi 0, %s55
      %s77 = sphi 0, %s79
      %s80 = sphi 0, %s77
      %s81 = sphi 0, %s80
      %s97 = sphi 0, %s81
      %s103 = sphi 0, %s105
      %s106 = sphi 0, %s103
      %s107 = sphi 0, %s106
      %s123 = sphi 0, %s107
      %s129 = sphi 0, %s131
      %s132 = sphi 0, %s129
      %s133 = sphi 0, %s132
      %s149 = sphi 0, %s133
    $region4: #{tpu_custom_call.1} parent=1 // loop_header_branch
      %23 = sbr.rel (%p21) target = $region8
    $region5: #{tpu_custom_call.1} parent=1 // loop_body
      %s25 = ssub.s32 %s20, 1
      %s26 = ssub.s32 %s20, 2
      %s27 = sadd.s32 %s20, 1
      %s29 = sadd.s32 %s28, 1
      %p32 = scmp.eq.s32.totalorder %s20, 3
      %p33 = scmp.ne.s32.totalorder %s28, %s30
      %p34 = scmp.eq.s32.totalorder %s20, 0
      %p35 = por %p33, %p34
      %p36 = scmp.ne.s32.totalorder %s28, %s30
      %p37 = scmp.eq.s32.totalorder %s25, 3
      %p38 = por %p36, %p37
      %p39 = scmp.ne.s32.totalorder %s30, %s31
      %p40 = scmp.eq.s32.totalorder %s25, 0
      %p41 = por %p39, %p40
      %p42 = scmp.ne.s32.totalorder %s30, %s31
      %p43 = scmp.eq.s32.totalorder %s26, 3
      %p44 = por %p42, %p43
      %p46 = scmp.ne.s32.totalorder %s31, %s45
      %p47 = scmp.eq.s32.totalorder %s26, 0
      %p48 = por %p46, %p47
      %s49 = ssub.s32 %s20, %s27
      %p50 = scmp.eq.s32.totalorder %s49, 0
      %s52 = sadd.s32 %s51, 1
      %s53 = scalar_select %p50, %s51, %s52
      %p56 = pneg %p50
      %p57 = scmp.eq.s32.totalorder %s20, 3
      %p58 = por %p56, %p57
      %p59 = scmp.ne.s32.totalorder %s51, %s54
      %p60 = scmp.eq.s32.totalorder %s20, 0
      %p61 = por %p59, %p60
      %p62 = scmp.ne.s32.totalorder %s51, %s54
      %p63 = scmp.eq.s32.totalorder %s25, 3
      %p64 = por %p62, %p63
      %p65 = scmp.ne.s32.totalorder %s54, %s55
      %p66 = scmp.eq.s32.totalorder %s25, 0
      %p67 = por %p65, %p66
      %p68 = scmp.ne.s32.totalorder %s54, %s55
      %p69 = scmp.eq.s32.totalorder %s26, 3
      %p70 = por %p68, %p69
      %p72 = scmp.ne.s32.totalorder %s55, %s71
      %p73 = scmp.eq.s32.totalorder %s26, 0
      %p74 = por %p72, %p73
      %s75 = ssub.s32 %s20, %s27
      %p76 = scmp.eq.s32.totalorder %s75, 0
      %s78 = sadd.s32 %s77, 1
      %s79 = scalar_select %p76, %s77, %s78
      %p82 = pneg %p76
      %p83 = scmp.eq.s32.totalorder %s20, 3
      %p84 = por %p82, %p83
      %p85 = scmp.ne.s32.totalorder %s77, %s80
      %p86 = scmp.eq.s32.totalorder %s20, 0
      %p87 = por %p85, %p86
      %p88 = scmp.ne.s32.totalorder %s77, %s80
      %p89 = scmp.eq.s32.totalorder %s25, 3
      %p90 = por %p88, %p89
      %p91 = scmp.ne.s32.totalorder %s80, %s81
      %p92 = scmp.eq.s32.totalorder %s25, 0
      %p93 = por %p91, %p92
      %p94 = scmp.ne.s32.totalorder %s80, %s81
      %p95 = scmp.eq.s32.totalorder %s26, 3
      %p96 = por %p94, %p95
      %p98 = scmp.ne.s32.totalorder %s81, %s97
      %p99 = scmp.eq.s32.totalorder %s26, 0
      %p100 = por %p98, %p99
      %s101 = ssub.s32 %s20, %s27
      %p102 = scmp.eq.s32.totalorder %s101, 0
      %s104 = sadd.s32 %s103, 1
      %s105 = scalar_select %p102, %s103, %s104
      %p108 = pneg %p102
      %p109 = scmp.eq.s32.totalorder %s20, 3
      %p110 = por %p108, %p109
      %p111 = scmp.ne.s32.totalorder %s103, %s106
      %p112 = scmp.eq.s32.totalorder %s20, 0
      %p113 = por %p111, %p112
      %p114 = scmp.ne.s32.totalorder %s103, %s106
      %p115 = scmp.eq.s32.totalorder %s25, 3
      %p116 = por %p114, %p115
      %p117 = scmp.ne.s32.totalorder %s106, %s107
      %p118 = scmp.eq.s32.totalorder %s25, 0
      %p119 = por %p117, %p118
      %p120 = scmp.ne.s32.totalorder %s106, %s107
      %p121 = scmp.eq.s32.totalorder %s26, 3
      %p122 = por %p120, %p121
      %p124 = scmp.ne.s32.totalorder %s107, %s123
      %p125 = scmp.eq.s32.totalorder %s26, 0
      %p126 = por %p124, %p125
      %s127 = ssub.s32 %s20, %s27
      %p128 = scmp.eq.s32.totalorder %s127, 0
      %s130 = sadd.s32 %s129, 1
      %s131 = scalar_select %p128, %s129, %s130
      %p134 = pneg %p128
      %p135 = scmp.eq.s32.totalorder %s20, 3
      %p136 = por %p134, %p135
      %p137 = scmp.ne.s32.totalorder %s129, %s132
      %p138 = scmp.eq.s32.totalorder %s20, 0
      %p139 = por %p137, %p138
      %p140 = scmp.ne.s32.totalorder %s129, %s132
      %p141 = scmp.eq.s32.totalorder %s25, 3
      %p142 = por %p140, %p141
      %p143 = scmp.ne.s32.totalorder %s132, %s133
      %p144 = scmp.eq.s32.totalorder %s25, 0
      %p145 = por %p143, %p144
      %p146 = scmp.ne.s32.totalorder %s132, %s133
      %p147 = scmp.eq.s32.totalorder %s26, 3
      %p148 = por %p146, %p147
      %p150 = scmp.ne.s32.totalorder %s133, %s149
      %p151 = scmp.eq.s32.totalorder %s26, 0
      %p152 = por %p150, %p151
      %p153 = scmp.le.s32.totalorder 1, %s20
      %p154 = scmp.lt.s32.totalorder %s20, 5
      %p155 = pnand %p153, %p154
      %p156 = pneg %p155
      // Predicated region
      $region9: #{tpu_custom_call.1} parent=5 // pred_check
        _
      $region10: #{tpu_custom_call.1} parent=5 // pred_check_branch
        %158 = sbr.rel (%p155) target = $region12
      $region11: #{tpu_custom_call.1} parent=5 // pred_region
        %s159 = ssub.s32 %s20, 1
        // Predicated region
        $region13: #{tpu_custom_call.1} parent=11 // pred_check
          %p160 = pneg %p41
        $region14: #{tpu_custom_call.1} parent=11 // pred_check_branch
          %162 = sbr.rel (%p160) target = $region16
        $region15: #{tpu_custom_call.1} parent=11 // pred_region
          %164 = vsyncadd [#allocation3], 0
          %s165 = sshll.u32 %s0, 4
          %s166 = int_to_ptr.hbm [resolvable:$true] %s165
          %s167 = sshll.u32 [#allocation2], 4
          %s168 = int_to_ptr.vmem [resolvable:$true] %s167
          %173 = dma.hbm_to_vmem [thread:$0]  %s166, 4096, %s168, [#allocation3], 512, 512, 32
        $region16: #{tpu_custom_call.1} parent=11 // pred_fallthru
          _
      $region12: #{tpu_custom_call.1} parent=5 // pred_fallthru
        _
      %p174 = scmp.lt.s32.totalorder %s20, 4
      // Predicated region
      $region17: #{tpu_custom_call.1} parent=5 // pred_check
        %p175 = pneg %p174
      $region18: #{tpu_custom_call.1} parent=5 // pred_check_branch
        %177 = sbr.rel (%p175) target = $region20
      $region19: #{tpu_custom_call.1} parent=5 // pred_region
        // Predicated region
        $region21: #{tpu_custom_call.1} parent=19 // pred_check
          %p178 = pneg %p61
        $region22: #{tpu_custom_call.1} parent=19 // pred_check_branch
          %180 = sbr.rel (%p178) target = $region24
        $region23: #{tpu_custom_call.1} parent=19 // pred_region
          %s181 = sand.u32 %s20, 1
          %s182 = scalar_lea.sflag [#allocation6], %s181
          %s183 = sand.u32 %s51, 1
          %s184 = smul.addr %s183, 2048
          %s185 = scalar_lea.vmem [#allocation5], %s184
          %s186 = smul.u32 4, %s20
          %188 = vsyncadd %s182, 0
          %s189 = smul.addr %s186, 4
          %s190 = scalar_lea.hbm %s1, %s189
          %s191 = sshll.u32 %s190, 4
          %s192 = int_to_ptr.hbm [resolvable:$true] %s191
          %s193 = sshll.u32 %s185, 4
          %s194 = int_to_ptr.vmem [resolvable:$true] %s193
          %199 = dma.hbm_to_vmem [thread:$0]  %s192, 32768, %s194, %s182, 1024, 256, 16
        $region24: #{tpu_custom_call.1} parent=19 // pred_fallthru
          _
        // Predicated region
        $region25: #{tpu_custom_call.1} parent=19 // pred_check
          %p200 = pneg %p87
        $region26: #{tpu_custom_call.1} parent=19 // pred_check_branch
          %202 = sbr.rel (%p200) target = $region28
        $region27: #{tpu_custom_call.1} parent=19 // pred_region
          %s203 = sand.u32 %s20, 1
          %s204 = scalar_lea.sflag [#allocation6], %s203
          %s205 = sand.u32 %s77, 1
          %s206 = smul.addr %s205, 48
          %s207 = scalar_lea.vmem [#allocation7], %s206
          %s208 = smul.u32 4, %s20
          %210 = vsyncadd %s204, 0
          %s211 = smul.addr %s208, 4
          %s212 = scalar_lea.hbm %s2, %s211
          %s213 = sshll.u32 %s212, 4
          %s214 = int_to_ptr.hbm [resolvable:$true] %s213
          %s215 = sshll.u32 %s207, 4
          %s216 = int_to_ptr.vmem [resolvable:$true] %s215
          %221 = dma.hbm_to_vmem [thread:$0]  %s214, 768, %s216, %s204, 1024, 256, 16
        $region28: #{tpu_custom_call.1} parent=19 // pred_fallthru
          _
        // Predicated region
        $region29: #{tpu_custom_call.1} parent=19 // pred_check
          %p222 = pneg %p113
        $region30: #{tpu_custom_call.1} parent=19 // pred_check_branch
          %224 = sbr.rel (%p222) target = $region32
        $region31: #{tpu_custom_call.1} parent=19 // pred_region
          %s225 = sand.u32 %s103, 1
          %s226 = scalar_lea.sflag [#allocation9], %s225
          %s227 = sand.u32 %s103, 1
          %s228 = smul.addr %s227, 4
          %s229 = scalar_lea.vmem [#allocation8], %s228
          %s230 = smul.u32 4, %s20
          %232 = vsyncadd %s226, 0
          %s233 = scalar_lea.hbm %s3, %s230
          %s235 = sshll.u32 %s233, 4
          %s236 = int_to_ptr.hbm [resolvable:$true] %s235
          %s237 = sshll.u32 %s229, 4
          %s238 = int_to_ptr.vmem [resolvable:$true] %s237
          %240 = dma.hbm_to_vmem [thread:$0]  %s236, 64, %s238, %s226
        $region32: #{tpu_custom_call.1} parent=19 // pred_fallthru
          _
      $region20: #{tpu_custom_call.1} parent=5 // pred_fallthru
        _
      %p241 = scmp.le.s32.totalorder 1, %s20
      %p242 = scmp.lt.s32.totalorder %s20, 5
      %p243 = pnand %p241, %p242
      %p244 = pneg %p243
      // Predicated region
      $region33: #{tpu_custom_call.1} parent=5 // pred_check
        _
      $region34: #{tpu_custom_call.1} parent=5 // pred_check_branch
        %246 = sbr.rel (%p243) target = $region36
      $region35: #{tpu_custom_call.1} parent=5 // pred_region
        %s247 = ssub.s32 %s20, 1
        // Predicated region
        $region37: #{tpu_custom_call.1} parent=35 // pred_check
          %p248 = pneg %p41
        $region38: #{tpu_custom_call.1} parent=35 // pred_check_branch
          %250 = sbr.rel (%p248) target = $region40
        $region39: #{tpu_custom_call.1} parent=35 // pred_region
          %252 = dma.done [#allocation3], 4096
        $region40: #{tpu_custom_call.1} parent=35 // pred_fallthru
          _
        %s253 = sand.u32 %s25, 1
        %s254 = scalar_lea.sflag [#allocation6], %s253
        %s255 = sand.u32 %s54, 1
        %s256 = smul.addr %s255, 2048
        %s257 = scalar_lea.vmem [#allocation5], %s256
        // Predicated region
        $region41: #{tpu_custom_call.1} parent=35 // pred_check
          %p258 = pneg %p67
        $region42: #{tpu_custom_call.1} parent=35 // pred_check_branch
          %260 = sbr.rel (%p258) target = $region44
        $region43: #{tpu_custom_call.1} parent=35 // pred_region
          %262 = dma.done %s254, 32768
        $region44: #{tpu_custom_call.1} parent=35 // pred_fallthru
          _
        %s263 = sand.u32 %s25, 1
        %s264 = scalar_lea.sflag [#allocation6], %s263
        %s265 = sand.u32 %s80, 1
        %s266 = smul.addr %s265, 48
        %s267 = scalar_lea.vmem [#allocation7], %s266
        // Predicated region
        $region45: #{tpu_custom_call.1} parent=35 // pred_check
          %p268 = pneg %p93
        $region46: #{tpu_custom_call.1} parent=35 // pred_check_branch
          %270 = sbr.rel (%p268) target = $region48
        $region47: #{tpu_custom_call.1} parent=35 // pred_region
          %272 = dma.done %s264, 768
        $region48: #{tpu_custom_call.1} parent=35 // pred_fallthru
          _
        %s273 = sand.u32 %s106, 1
        %s274 = scalar_lea.sflag [#allocation9], %s273
        %s275 = sand.u32 %s106, 1
        %s276 = smul.addr %s275, 4
        %s277 = scalar_lea.vmem [#allocation8], %s276
        // Predicated region
        $region49: #{tpu_custom_call.1} parent=35 // pred_check
          %p278 = pneg %p119
        $region50: #{tpu_custom_call.1} parent=35 // pred_check_branch
          %280 = sbr.rel (%p278) target = $region52
        $region51: #{tpu_custom_call.1} parent=35 // pred_region
          %282 = dma.done %s274, 64
        $region52: #{tpu_custom_call.1} parent=35 // pred_fallthru
          _
        %p283 = pneg %p41
        %p284 = pneg %p38
        %s285 = sand.u32 %s25, 1
        %s286 = scalar_lea.sflag [#allocation6], %s285
        %s287 = sand.u32 %s54, 1
        %s288 = smul.addr %s287, 2048
        %s289 = scalar_lea.vmem [#allocation5], %s288
        %p290 = pneg %p67
        %p291 = pneg %p64
        %s292 = sand.u32 %s25, 1
        %s293 = scalar_lea.sflag [#allocation6], %s292
        %s294 = sand.u32 %s80, 1
        %s295 = smul.addr %s294, 48
        %s296 = scalar_lea.vmem [#allocation7], %s295
        %p297 = pneg %p93
        %p298 = pneg %p90
        %s299 = sand.u32 %s106, 1
        %s300 = scalar_lea.sflag [#allocation9], %s299
        %s301 = sand.u32 %s106, 1
        %s302 = smul.addr %s301, 4
        %s303 = scalar_lea.vmem [#allocation8], %s302
        %p304 = pneg %p119
        %p305 = pneg %p116
        %p306 = pneg %p145
        %p307 = pneg %p142
        %s308 = sand.u32 %s132, 1
        %s309 = scalar_lea.sflag [#allocation4], %s308
        %s310 = sand.u32 %s132, 1
        %s311 = smul.addr %s310, 8
        %s312 = scalar_lea.vmem [#allocation10], %s311
        %s313 = smul.u32 4, %s25
        %s314 = smul.u32 4, %s25
        %s315 = smul.u32 4, %s25
        %s316 = smul.u32 4, %s25
        %v317 = vld [vmem:[#allocation2] sm:$0xff]
        %v318 = vld [vmem:[#allocation2 + $0x8] sm:$0xff]
        %v319 = vld [vmem:[#allocation2 + $0x10] sm:$0xff]
        %v320 = vld [vmem:[#allocation2 + $0x18] sm:$0xff]
        %v321 = vld [vmem:[#allocation2 + $0x20] sm:$0xff]
        %v322 = vld [vmem:[#allocation2 + $0x28] sm:$0xff]
        %v323 = vld [vmem:[#allocation2 + $0x30] sm:$0xff]
        %v324 = vld [vmem:[#allocation2 + $0x38] sm:$0xff]
        %v325 = vld [vmem:[#allocation2 + $0x40] sm:$0xff]
        %v326 = vld [vmem:[#allocation2 + $0x48] sm:$0xff]
        %v327 = vld [vmem:[#allocation2 + $0x50] sm:$0xff]
        %v328 = vld [vmem:[#allocation2 + $0x58] sm:$0xff]
        %v329 = vld [vmem:[#allocation2 + $0x60] sm:$0xff]
        %v330 = vld [vmem:[#allocation2 + $0x68] sm:$0xff]
        %v331 = vld [vmem:[#allocation2 + $0x70] sm:$0xff]
        %v332 = vld [vmem:[#allocation2 + $0x78] sm:$0xff]
        %v333 = vld [vmem:[#allocation2 + $0x80] sm:$0xff]
        %v334 = vld [vmem:[#allocation2 + $0x88] sm:$0xff]
        %v335 = vld [vmem:[#allocation2 + $0x90] sm:$0xff]
        %v336 = vld [vmem:[#allocation2 + $0x98] sm:$0xff]
        %v337 = vld [vmem:[#allocation2 + $0xa0] sm:$0xff]
        %v338 = vld [vmem:[#allocation2 + $0xa8] sm:$0xff]
        %v339 = vld [vmem:[#allocation2 + $0xb0] sm:$0xff]
        %v340 = vld [vmem:[#allocation2 + $0xb8] sm:$0xff]
        %v341 = vld [vmem:[#allocation2 + $0xc0] sm:$0xff]
        %v342 = vld [vmem:[#allocation2 + $0xc8] sm:$0xff]
        %v343 = vld [vmem:[#allocation2 + $0xd0] sm:$0xff]
        %v344 = vld [vmem:[#allocation2 + $0xd8] sm:$0xff]
        %v345 = vld [vmem:[#allocation2 + $0xe0] sm:$0xff]
        %v346 = vld [vmem:[#allocation2 + $0xe8] sm:$0xff]
        %v347 = vld [vmem:[#allocation2 + $0xf0] sm:$0xff]
        %v348 = vld [vmem:[#allocation2 + $0xf8] sm:$0xff]
        %v349 = vld [vmem:[%s257] sm:$0xff]
        %v350 = vld [vmem:[%s257 + $0x8] sm:$0xff]
        %v351 = vld [vmem:[%s257 + $0x10] sm:$0xff]
        %v352 = vld [vmem:[%s257 + $0x18] sm:$0xff]
        %v353 = vld [vmem:[%s257 + $0x20] sm:$0xff]
        %v354 = vld [vmem:[%s257 + $0x28] sm:$0xff]
        %v355 = vld [vmem:[%s257 + $0x30] sm:$0xff]
        %v356 = vld [vmem:[%s257 + $0x38] sm:$0xff]
        %v357 = vld [vmem:[%s257 + $0x40] sm:$0xff]
        %v358 = vld [vmem:[%s257 + $0x48] sm:$0xff]
        %v359 = vld [vmem:[%s257 + $0x50] sm:$0xff]
        %v360 = vld [vmem:[%s257 + $0x58] sm:$0xff]
        %v361 = vld [vmem:[%s257 + $0x60] sm:$0xff]
        %v362 = vld [vmem:[%s257 + $0x68] sm:$0xff]
        %v363 = vld [vmem:[%s257 + $0x70] sm:$0xff]
        %v364 = vld [vmem:[%s257 + $0x78] sm:$0xff]
        %v365 = vld [vmem:[%s257 + $0x80] sm:$0xff]
        %v366 = vld [vmem:[%s257 + $0x88] sm:$0xff]
        %v367 = vld [vmem:[%s257 + $0x90] sm:$0xff]
        %v368 = vld [vmem:[%s257 + $0x98] sm:$0xff]
        %v369 = vld [vmem:[%s257 + $0xa0] sm:$0xff]
        %v370 = vld [vmem:[%s257 + $0xa8] sm:$0xff]
        %v371 = vld [vmem:[%s257 + $0xb0] sm:$0xff]
        %v372 = vld [vmem:[%s257 + $0xb8] sm:$0xff]
        %v373 = vld [vmem:[%s257 + $0xc0] sm:$0xff]
        %v374 = vld [vmem:[%s257 + $0xc8] sm:$0xff]
        %v375 = vld [vmem:[%s257 + $0xd0] sm:$0xff]
        %v376 = vld [vmem:[%s257 + $0xd8] sm:$0xff]
        %v377 = vld [vmem:[%s257 + $0xe0] sm:$0xff]
        %v378 = vld [vmem:[%s257 + $0xe8] sm:$0xff]
        %v379 = vld [vmem:[%s257 + $0xf0] sm:$0xff]
        %v380 = vld [vmem:[%s257 + $0xf8] sm:$0xff]
        %v381 = vld [vmem:[%s257 + $0x100] sm:$0xff]
        %v382 = vld [vmem:[%s257 + $0x108] sm:$0xff]
        %v383 = vld [vmem:[%s257 + $0x110] sm:$0xff]
        %v384 = vld [vmem:[%s257 + $0x118] sm:$0xff]
        %v385 = vld [vmem:[%s257 + $0x120] sm:$0xff]
        %v386 = vld [vmem:[%s257 + $0x128] sm:$0xff]
        %v387 = vld [vmem:[%s257 + $0x130] sm:$0xff]
        %v388 = vld [vmem:[%s257 + $0x138] sm:$0xff]
        %v389 = vld [vmem:[%s257 + $0x140] sm:$0xff]
        %v390 = vld [vmem:[%s257 + $0x148] sm:$0xff]
        %v391 = vld [vmem:[%s257 + $0x150] sm:$0xff]
        %v392 = vld [vmem:[%s257 + $0x158] sm:$0xff]
        %v393 = vld [vmem:[%s257 + $0x160] sm:$0xff]
        %v394 = vld [vmem:[%s257 + $0x168] sm:$0xff]
        %v395 = vld [vmem:[%s257 + $0x170] sm:$0xff]
        %v396 = vld [vmem:[%s257 + $0x178] sm:$0xff]
        %v397 = vld [vmem:[%s257 + $0x180] sm:$0xff]
        %v398 = vld [vmem:[%s257 + $0x188] sm:$0xff]
        %v399 = vld [vmem:[%s257 + $0x190] sm:$0xff]
        %v400 = vld [vmem:[%s257 + $0x198] sm:$0xff]
        %v401 = vld [vmem:[%s257 + $0x1a0] sm:$0xff]
        %v402 = vld [vmem:[%s257 + $0x1a8] sm:$0xff]
        %v403 = vld [vmem:[%s257 + $0x1b0] sm:$0xff]
        %v404 = vld [vmem:[%s257 + $0x1b8] sm:$0xff]
        %v405 = vld [vmem:[%s257 + $0x1c0] sm:$0xff]
        %v406 = vld [vmem:[%s257 + $0x1c8] sm:$0xff]
        %v407 = vld [vmem:[%s257 + $0x1d0] sm:$0xff]
        %v408 = vld [vmem:[%s257 + $0x1d8] sm:$0xff]
        %v409 = vld [vmem:[%s257 + $0x1e0] sm:$0xff]
        %v410 = vld [vmem:[%s257 + $0x1e8] sm:$0xff]
        %v411 = vld [vmem:[%s257 + $0x1f0] sm:$0xff]
        %v412 = vld [vmem:[%s257 + $0x1f8] sm:$0xff]
        %v413 = vld [vmem:[%s257 + $0x200] sm:$0xff]
        %v414 = vld [vmem:[%s257 + $0x208] sm:$0xff]
        %v415 = vld [vmem:[%s257 + $0x210] sm:$0xff]
        %v416 = vld [vmem:[%s257 + $0x218] sm:$0xff]
        %v417 = vld [vmem:[%s257 + $0x220] sm:$0xff]
        %v418 = vld [vmem:[%s257 + $0x228] sm:$0xff]
        %v419 = vld [vmem:[%s257 + $0x230] sm:$0xff]
        %v420 = vld [vmem:[%s257 + $0x238] sm:$0xff]
        %v421 = vld [vmem:[%s257 + $0x240] sm:$0xff]
        %v422 = vld [vmem:[%s257 + $0x248] sm:$0xff]
        %v423 = vld [vmem:[%s257 + $0x250] sm:$0xff]
        %v424 = vld [vmem:[%s257 + $0x258] sm:$0xff]
        %v425 = vld [vmem:[%s257 + $0x260] sm:$0xff]
        %v426 = vld [vmem:[%s257 + $0x268] sm:$0xff]
        %v427 = vld [vmem:[%s257 + $0x270] sm:$0xff]
        %v428 = vld [vmem:[%s257 + $0x278] sm:$0xff]
        %v429 = vld [vmem:[%s257 + $0x280] sm:$0xff]
        %v430 = vld [vmem:[%s257 + $0x288] sm:$0xff]
        %v431 = vld [vmem:[%s257 + $0x290] sm:$0xff]
        %v432 = vld [vmem:[%s257 + $0x298] sm:$0xff]
        %v433 = vld [vmem:[%s257 + $0x2a0] sm:$0xff]
        %v434 = vld [vmem:[%s257 + $0x2a8] sm:$0xff]
        %v435 = vld [vmem:[%s257 + $0x2b0] sm:$0xff]
        %v436 = vld [vmem:[%s257 + $0x2b8] sm:$0xff]
        %v437 = vld [vmem:[%s257 + $0x2c0] sm:$0xff]
        %v438 = vld [vmem:[%s257 + $0x2c8] sm:$0xff]
        %v439 = vld [vmem:[%s257 + $0x2d0] sm:$0xff]
        %v440 = vld [vmem:[%s257 + $0x2d8] sm:$0xff]
        %v441 = vld [vmem:[%s257 + $0x2e0] sm:$0xff]
        %v442 = vld [vmem:[%s257 + $0x2e8] sm:$0xff]
        %v443 = vld [vmem:[%s257 + $0x2f0] sm:$0xff]
        %v444 = vld [vmem:[%s257 + $0x2f8] sm:$0xff]
        %v445 = vld [vmem:[%s257 + $0x300] sm:$0xff]
        %v446 = vld [vmem:[%s257 + $0x308] sm:$0xff]
        %v447 = vld [vmem:[%s257 + $0x310] sm:$0xff]
        %v448 = vld [vmem:[%s257 + $0x318] sm:$0xff]
        %v449 = vld [vmem:[%s257 + $0x320] sm:$0xff]
        %v450 = vld [vmem:[%s257 + $0x328] sm:$0xff]
        %v451 = vld [vmem:[%s257 + $0x330] sm:$0xff]
        %v452 = vld [vmem:[%s257 + $0x338] sm:$0xff]
        %v453 = vld [vmem:[%s257 + $0x340] sm:$0xff]
        %v454 = vld [vmem:[%s257 + $0x348] sm:$0xff]
        %v455 = vld [vmem:[%s257 + $0x350] sm:$0xff]
        %v456 = vld [vmem:[%s257 + $0x358] sm:$0xff]
        %v457 = vld [vmem:[%s257 + $0x360] sm:$0xff]
        %v458 = vld [vmem:[%s257 + $0x368] sm:$0xff]
        %v459 = vld [vmem:[%s257 + $0x370] sm:$0xff]
        %v460 = vld [vmem:[%s257 + $0x378] sm:$0xff]
        %v461 = vld [vmem:[%s257 + $0x380] sm:$0xff]
        %v462 = vld [vmem:[%s257 + $0x388] sm:$0xff]
        %v463 = vld [vmem:[%s257 + $0x390] sm:$0xff]
        %v464 = vld [vmem:[%s257 + $0x398] sm:$0xff]
        %v465 = vld [vmem:[%s257 + $0x3a0] sm:$0xff]
        %v466 = vld [vmem:[%s257 + $0x3a8] sm:$0xff]
        %v467 = vld [vmem:[%s257 + $0x3b0] sm:$0xff]
        %v468 = vld [vmem:[%s257 + $0x3b8] sm:$0xff]
        %v469 = vld [vmem:[%s257 + $0x3c0] sm:$0xff]
        %v470 = vld [vmem:[%s257 + $0x3c8] sm:$0xff]
        %v471 = vld [vmem:[%s257 + $0x3d0] sm:$0xff]
        %v472 = vld [vmem:[%s257 + $0x3d8] sm:$0xff]
        %v473 = vld [vmem:[%s257 + $0x3e0] sm:$0xff]
        %v474 = vld [vmem:[%s257 + $0x3e8] sm:$0xff]
        %v475 = vld [vmem:[%s257 + $0x3f0] sm:$0xff]
        %v476 = vld [vmem:[%s257 + $0x3f8] sm:$0xff]
        %v477 = vld [vmem:[%s257 + $0x400] sm:$0xff]
        %v478 = vld [vmem:[%s257 + $0x408] sm:$0xff]
        %v479 = vld [vmem:[%s257 + $0x410] sm:$0xff]
        %v480 = vld [vmem:[%s257 + $0x418] sm:$0xff]
        %v481 = vld [vmem:[%s257 + $0x420] sm:$0xff]
        %v482 = vld [vmem:[%s257 + $0x428] sm:$0xff]
        %v483 = vld [vmem:[%s257 + $0x430] sm:$0xff]
        %v484 = vld [vmem:[%s257 + $0x438] sm:$0xff]
        %v485 = vld [vmem:[%s257 + $0x440] sm:$0xff]
        %v486 = vld [vmem:[%s257 + $0x448] sm:$0xff]
        %v487 = vld [vmem:[%s257 + $0x450] sm:$0xff]
        %v488 = vld [vmem:[%s257 + $0x458] sm:$0xff]
        %v489 = vld [vmem:[%s257 + $0x460] sm:$0xff]
        %v490 = vld [vmem:[%s257 + $0x468] sm:$0xff]
        %v491 = vld [vmem:[%s257 + $0x470] sm:$0xff]
        %v492 = vld [vmem:[%s257 + $0x478] sm:$0xff]
        %v493 = vld [vmem:[%s257 + $0x480] sm:$0xff]
        %v494 = vld [vmem:[%s257 + $0x488] sm:$0xff]
        %v495 = vld [vmem:[%s257 + $0x490] sm:$0xff]
        %v496 = vld [vmem:[%s257 + $0x498] sm:$0xff]
        %v497 = vld [vmem:[%s257 + $0x4a0] sm:$0xff]
        %v498 = vld [vmem:[%s257 + $0x4a8] sm:$0xff]
        %v499 = vld [vmem:[%s257 + $0x4b0] sm:$0xff]
        %v500 = vld [vmem:[%s257 + $0x4b8] sm:$0xff]
        %v501 = vld [vmem:[%s257 + $0x4c0] sm:$0xff]
        %v502 = vld [vmem:[%s257 + $0x4c8] sm:$0xff]
        %v503 = vld [vmem:[%s257 + $0x4d0] sm:$0xff]
        %v504 = vld [vmem:[%s257 + $0x4d8] sm:$0xff]
        %v505 = vld [vmem:[%s257 + $0x4e0] sm:$0xff]
        %v506 = vld [vmem:[%s257 + $0x4e8] sm:$0xff]
        %v507 = vld [vmem:[%s257 + $0x4f0] sm:$0xff]
        %v508 = vld [vmem:[%s257 + $0x4f8] sm:$0xff]
        %v509 = vld [vmem:[%s257 + $0x500] sm:$0xff]
        %v510 = vld [vmem:[%s257 + $0x508] sm:$0xff]
        %v511 = vld [vmem:[%s257 + $0x510] sm:$0xff]
        %v512 = vld [vmem:[%s257 + $0x518] sm:$0xff]
        %v513 = vld [vmem:[%s257 + $0x520] sm:$0xff]
        %v514 = vld [vmem:[%s257 + $0x528] sm:$0xff]
        %v515 = vld [vmem:[%s257 + $0x530] sm:$0xff]
        %v516 = vld [vmem:[%s257 + $0x538] sm:$0xff]
        %v517 = vld [vmem:[%s257 + $0x540] sm:$0xff]
        %v518 = vld [vmem:[%s257 + $0x548] sm:$0xff]
        %v519 = vld [vmem:[%s257 + $0x550] sm:$0xff]
        %v520 = vld [vmem:[%s257 + $0x558] sm:$0xff]
        %v521 = vld [vmem:[%s257 + $0x560] sm:$0xff]
        %v522 = vld [vmem:[%s257 + $0x568] sm:$0xff]
        %v523 = vld [vmem:[%s257 + $0x570] sm:$0xff]
        %v524 = vld [vmem:[%s257 + $0x578] sm:$0xff]
        %v525 = vld [vmem:[%s257 + $0x580] sm:$0xff]
        %v526 = vld [vmem:[%s257 + $0x588] sm:$0xff]
        %v527 = vld [vmem:[%s257 + $0x590] sm:$0xff]
        %v528 = vld [vmem:[%s257 + $0x598] sm:$0xff]
        %v529 = vld [vmem:[%s257 + $0x5a0] sm:$0xff]
        %v530 = vld [vmem:[%s257 + $0x5a8] sm:$0xff]
        %v531 = vld [vmem:[%s257 + $0x5b0] sm:$0xff]
        %v532 = vld [vmem:[%s257 + $0x5b8] sm:$0xff]
        %v533 = vld [vmem:[%s257 + $0x5c0] sm:$0xff]
        %v534 = vld [vmem:[%s257 + $0x5c8] sm:$0xff]
        %v535 = vld [vmem:[%s257 + $0x5d0] sm:$0xff]
        %v536 = vld [vmem:[%s257 + $0x5d8] sm:$0xff]
        %v537 = vld [vmem:[%s257 + $0x5e0] sm:$0xff]
        %v538 = vld [vmem:[%s257 + $0x5e8] sm:$0xff]
        %v539 = vld [vmem:[%s257 + $0x5f0] sm:$0xff]
        %v540 = vld [vmem:[%s257 + $0x5f8] sm:$0xff]
        %v541 = vld [vmem:[%s257 + $0x600] sm:$0xff]
        %v542 = vld [vmem:[%s257 + $0x608] sm:$0xff]
        %v543 = vld [vmem:[%s257 + $0x610] sm:$0xff]
        %v544 = vld [vmem:[%s257 + $0x618] sm:$0xff]
        %v545 = vld [vmem:[%s257 + $0x620] sm:$0xff]
        %v546 = vld [vmem:[%s257 + $0x628] sm:$0xff]
        %v547 = vld [vmem:[%s257 + $0x630] sm:$0xff]
        %v548 = vld [vmem:[%s257 + $0x638] sm:$0xff]
        %v549 = vld [vmem:[%s257 + $0x640] sm:$0xff]
        %v550 = vld [vmem:[%s257 + $0x648] sm:$0xff]
        %v551 = vld [vmem:[%s257 + $0x650] sm:$0xff]
        %v552 = vld [vmem:[%s257 + $0x658] sm:$0xff]
        %v553 = vld [vmem:[%s257 + $0x660] sm:$0xff]
        %v554 = vld [vmem:[%s257 + $0x668] sm:$0xff]
        %v555 = vld [vmem:[%s257 + $0x670] sm:$0xff]
        %v556 = vld [vmem:[%s257 + $0x678] sm:$0xff]
        %v557 = vld [vmem:[%s257 + $0x680] sm:$0xff]
        %v558 = vld [vmem:[%s257 + $0x688] sm:$0xff]
        %v559 = vld [vmem:[%s257 + $0x690] sm:$0xff]
        %v560 = vld [vmem:[%s257 + $0x698] sm:$0xff]
        %v561 = vld [vmem:[%s257 + $0x6a0] sm:$0xff]
        %v562 = vld [vmem:[%s257 + $0x6a8] sm:$0xff]
        %v563 = vld [vmem:[%s257 + $0x6b0] sm:$0xff]
        %v564 = vld [vmem:[%s257 + $0x6b8] sm:$0xff]
        %v565 = vld [vmem:[%s257 + $0x6c0] sm:$0xff]
        %v566 = vld [vmem:[%s257 + $0x6c8] sm:$0xff]
        %v567 = vld [vmem:[%s257 + $0x6d0] sm:$0xff]
        %v568 = vld [vmem:[%s257 + $0x6d8] sm:$0xff]
        %v569 = vld [vmem:[%s257 + $0x6e0] sm:$0xff]
        %v570 = vld [vmem:[%s257 + $0x6e8] sm:$0xff]
        %v571 = vld [vmem:[%s257 + $0x6f0] sm:$0xff]
        %v572 = vld [vmem:[%s257 + $0x6f8] sm:$0xff]
        %v573 = vld [vmem:[%s257 + $0x700] sm:$0xff]
        %v574 = vld [vmem:[%s257 + $0x708] sm:$0xff]
        %v575 = vld [vmem:[%s257 + $0x710] sm:$0xff]
        %v576 = vld [vmem:[%s257 + $0x718] sm:$0xff]
        %v577 = vld [vmem:[%s257 + $0x720] sm:$0xff]
        %v578 = vld [vmem:[%s257 + $0x728] sm:$0xff]
        %v579 = vld [vmem:[%s257 + $0x730] sm:$0xff]
        %v580 = vld [vmem:[%s257 + $0x738] sm:$0xff]
        %v581 = vld [vmem:[%s257 + $0x740] sm:$0xff]
        %v582 = vld [vmem:[%s257 + $0x748] sm:$0xff]
        %v583 = vld [vmem:[%s257 + $0x750] sm:$0xff]
        %v584 = vld [vmem:[%s257 + $0x758] sm:$0xff]
        %v585 = vld [vmem:[%s257 + $0x760] sm:$0xff]
        %v586 = vld [vmem:[%s257 + $0x768] sm:$0xff]
        %v587 = vld [vmem:[%s257 + $0x770] sm:$0xff]
        %v588 = vld [vmem:[%s257 + $0x778] sm:$0xff]
        %v589 = vld [vmem:[%s257 + $0x780] sm:$0xff]
        %v590 = vld [vmem:[%s257 + $0x788] sm:$0xff]
        %v591 = vld [vmem:[%s257 + $0x790] sm:$0xff]
        %v592 = vld [vmem:[%s257 + $0x798] sm:$0xff]
        %v593 = vld [vmem:[%s257 + $0x7a0] sm:$0xff]
        %v594 = vld [vmem:[%s257 + $0x7a8] sm:$0xff]
        %v595 = vld [vmem:[%s257 + $0x7b0] sm:$0xff]
        %v596 = vld [vmem:[%s257 + $0x7b8] sm:$0xff]
        %v597 = vld [vmem:[%s257 + $0x7c0] sm:$0xff]
        %v598 = vld [vmem:[%s257 + $0x7c8] sm:$0xff]
        %v599 = vld [vmem:[%s257 + $0x7d0] sm:$0xff]
        %v600 = vld [vmem:[%s257 + $0x7d8] sm:$0xff]
        %v601 = vld [vmem:[%s257 + $0x7e0] sm:$0xff]
        %v602 = vld [vmem:[%s257 + $0x7e8] sm:$0xff]
        %v603 = vld [vmem:[%s257 + $0x7f0] sm:$0xff]
        %v604 = vld [vmem:[%s257 + $0x7f8] sm:$0xff]
        %v637 = vunpack.c.l.b16 %v317
        %v638 = vunpack.c.h.b16 %v317
        %v639 = vunpack.c.l.b16 %v318
        %v640 = vunpack.c.h.b16 %v318
        %v641 = vunpack.c.l.b16 %v319
        %v642 = vunpack.c.h.b16 %v319
        %v643 = vunpack.c.l.b16 %v320
        %v644 = vunpack.c.h.b16 %v320
        %v645 = vunpack.c.l.b16 %v321
        %v646 = vunpack.c.h.b16 %v321
        %v647 = vunpack.c.l.b16 %v322
        %v648 = vunpack.c.h.b16 %v322
        %v649 = vunpack.c.l.b16 %v323
        %v650 = vunpack.c.h.b16 %v323
        %v651 = vunpack.c.l.b16 %v324
        %v652 = vunpack.c.h.b16 %v324
        %v653 = vunpack.c.l.b16 %v325
        %v654 = vunpack.c.h.b16 %v325
        %v655 = vunpack.c.l.b16 %v326
        %v656 = vunpack.c.h.b16 %v326
        %v657 = vunpack.c.l.b16 %v327
        %v658 = vunpack.c.h.b16 %v327
        %v659 = vunpack.c.l.b16 %v328
        %v660 = vunpack.c.h.b16 %v328
        %v661 = vunpack.c.l.b16 %v329
        %v662 = vunpack.c.h.b16 %v329
        %v663 = vunpack.c.l.b16 %v330
        %v664 = vunpack.c.h.b16 %v330
        %v665 = vunpack.c.l.b16 %v331
        %v666 = vunpack.c.h.b16 %v331
        %v667 = vunpack.c.l.b16 %v332
        %v668 = vunpack.c.h.b16 %v332
        %v669 = vunpack.c.l.b16 %v333
        %v670 = vunpack.c.h.b16 %v333
        %v671 = vunpack.c.l.b16 %v334
        %v672 = vunpack.c.h.b16 %v334
        %v673 = vunpack.c.l.b16 %v335
        %v674 = vunpack.c.h.b16 %v335
        %v675 = vunpack.c.l.b16 %v336
        %v676 = vunpack.c.h.b16 %v336
        %v677 = vunpack.c.l.b16 %v337
        %v678 = vunpack.c.h.b16 %v337
        %v679 = vunpack.c.l.b16 %v338
        %v680 = vunpack.c.h.b16 %v338
        %v681 = vunpack.c.l.b16 %v339
        %v682 = vunpack.c.h.b16 %v339
        %v683 = vunpack.c.l.b16 %v340
        %v684 = vunpack.c.h.b16 %v340
        %v685 = vunpack.c.l.b16 %v341
        %v686 = vunpack.c.h.b16 %v341
        %v687 = vunpack.c.l.b16 %v342
        %v688 = vunpack.c.h.b16 %v342
        %v689 = vunpack.c.l.b16 %v343
        %v690 = vunpack.c.h.b16 %v343
        %v691 = vunpack.c.l.b16 %v344
        %v692 = vunpack.c.h.b16 %v344
        %v693 = vunpack.c.l.b16 %v345
        %v694 = vunpack.c.h.b16 %v345
        %v695 = vunpack.c.l.b16 %v346
        %v696 = vunpack.c.h.b16 %v346
        %v697 = vunpack.c.l.b16 %v347
        %v698 = vunpack.c.h.b16 %v347
        %v699 = vunpack.c.l.b16 %v348
        %v700 = vunpack.c.h.b16 %v348
        %v701 = vpack.c.b16 %v645, %v637
        %v702 = vpack.c.b16 %v646, %v638
        %v703 = vpack.c.b16 %v647, %v639
        %v704 = vpack.c.b16 %v648, %v640
        %v705 = vpack.c.b16 %v649, %v641
        %v706 = vpack.c.b16 %v650, %v642
        %v707 = vpack.c.b16 %v651, %v643
        %v708 = vpack.c.b16 %v652, %v644
        %v709 = vpack.c.b16 %v661, %v653
        %v710 = vpack.c.b16 %v662, %v654
        %v711 = vpack.c.b16 %v663, %v655
        %v712 = vpack.c.b16 %v664, %v656
        %v713 = vpack.c.b16 %v665, %v657
        %v714 = vpack.c.b16 %v666, %v658
        %v715 = vpack.c.b16 %v667, %v659
        %v716 = vpack.c.b16 %v668, %v660
        %v717 = vpack.c.b16 %v677, %v669
        %v718 = vpack.c.b16 %v678, %v670
        %v719 = vpack.c.b16 %v679, %v671
        %v720 = vpack.c.b16 %v680, %v672
        %v721 = vpack.c.b16 %v681, %v673
        %v722 = vpack.c.b16 %v682, %v674
        %v723 = vpack.c.b16 %v683, %v675
        %v724 = vpack.c.b16 %v684, %v676
        %v725 = vpack.c.b16 %v693, %v685
        %v726 = vpack.c.b16 %v694, %v686
        %v727 = vpack.c.b16 %v695, %v687
        %v728 = vpack.c.b16 %v696, %v688
        %v729 = vpack.c.b16 %v697, %v689
        %v730 = vpack.c.b16 %v698, %v690
        %v731 = vpack.c.b16 %v699, %v691
        %v732 = vpack.c.b16 %v700, %v692
        %v1021 = vunpack.c.l.b16 %v349
        %v1022 = vunpack.c.h.b16 %v349
        %v1023 = vunpack.c.l.b16 %v350
        %v1024 = vunpack.c.h.b16 %v350
        %v1025 = vunpack.c.l.b16 %v351
        %v1026 = vunpack.c.h.b16 %v351
        %v1027 = vunpack.c.l.b16 %v352
        %v1028 = vunpack.c.h.b16 %v352
        %v1029 = vunpack.c.l.b16 %v353
        %v1030 = vunpack.c.h.b16 %v353
        %v1031 = vunpack.c.l.b16 %v354
        %v1032 = vunpack.c.h.b16 %v354
        %v1033 = vunpack.c.l.b16 %v355
        %v1034 = vunpack.c.h.b16 %v355
        %v1035 = vunpack.c.l.b16 %v356
        %v1036 = vunpack.c.h.b16 %v356
        %v1037 = vunpack.c.l.b16 %v357
        %v1038 = vunpack.c.h.b16 %v357
        %v1039 = vunpack.c.l.b16 %v358
        %v1040 = vunpack.c.h.b16 %v358
        %v1041 = vunpack.c.l.b16 %v359
        %v1042 = vunpack.c.h.b16 %v359
        %v1043 = vunpack.c.l.b16 %v360
        %v1044 = vunpack.c.h.b16 %v360
        %v1045 = vunpack.c.l.b16 %v361
        %v1046 = vunpack.c.h.b16 %v361
        %v1047 = vunpack.c.l.b16 %v362
        %v1048 = vunpack.c.h.b16 %v362
        %v1049 = vunpack.c.l.b16 %v363
        %v1050 = vunpack.c.h.b16 %v363
        %v1051 = vunpack.c.l.b16 %v364
        %v1052 = vunpack.c.h.b16 %v364
        %v1053 = vunpack.c.l.b16 %v365
        %v1054 = vunpack.c.h.b16 %v365
        %v1055 = vunpack.c.l.b16 %v366
        %v1056 = vunpack.c.h.b16 %v366
        %v1057 = vunpack.c.l.b16 %v367
        %v1058 = vunpack.c.h.b16 %v367
        %v1059 = vunpack.c.l.b16 %v368
        %v1060 = vunpack.c.h.b16 %v368
        %v1061 = vunpack.c.l.b16 %v369
        %v1062 = vunpack.c.h.b16 %v369
        %v1063 = vunpack.c.l.b16 %v370
        %v1064 = vunpack.c.h.b16 %v370
        %v1065 = vunpack.c.l.b16 %v371
        %v1066 = vunpack.c.h.b16 %v371
        %v1067 = vunpack.c.l.b16 %v372
        %v1068 = vunpack.c.h.b16 %v372
        %v1069 = vunpack.c.l.b16 %v373
        %v1070 = vunpack.c.h.b16 %v373
        %v1071 = vunpack.c.l.b16 %v374
        %v1072 = vunpack.c.h.b16 %v374
        %v1073 = vunpack.c.l.b16 %v375
        %v1074 = vunpack.c.h.b16 %v375
        %v1075 = vunpack.c.l.b16 %v376
        %v1076 = vunpack.c.h.b16 %v376
        %v1077 = vunpack.c.l.b16 %v377
        %v1078 = vunpack.c.h.b16 %v377
        %v1079 = vunpack.c.l.b16 %v378
        %v1080 = vunpack.c.h.b16 %v378
        %v1081 = vunpack.c.l.b16 %v379
        %v1082 = vunpack.c.h.b16 %v379
        %v1083 = vunpack.c.l.b16 %v380
        %v1084 = vunpack.c.h.b16 %v380
        %v1085 = vunpack.c.l.b16 %v381
        %v1086 = vunpack.c.h.b16 %v381
        %v1087 = vunpack.c.l.b16 %v382
        %v1088 = vunpack.c.h.b16 %v382
        %v1089 = vunpack.c.l.b16 %v383
        %v1090 = vunpack.c.h.b16 %v383
        %v1091 = vunpack.c.l.b16 %v384
        %v1092 = vunpack.c.h.b16 %v384
        %v1093 = vunpack.c.l.b16 %v385
        %v1094 = vunpack.c.h.b16 %v385
        %v1095 = vunpack.c.l.b16 %v386
        %v1096 = vunpack.c.h.b16 %v386
        %v1097 = vunpack.c.l.b16 %v387
        %v1098 = vunpack.c.h.b16 %v387
        %v1099 = vunpack.c.l.b16 %v388
        %v1100 = vunpack.c.h.b16 %v388
        %v1101 = vunpack.c.l.b16 %v389
        %v1102 = vunpack.c.h.b16 %v389
        %v1103 = vunpack.c.l.b16 %v390
        %v1104 = vunpack.c.h.b16 %v390
        %v1105 = vunpack.c.l.b16 %v391
        %v1106 = vunpack.c.h.b16 %v391
        %v1107 = vunpack.c.l.b16 %v392
        %v1108 = vunpack.c.h.b16 %v392
        %v1109 = vunpack.c.l.b16 %v393
        %v1110 = vunpack.c.h.b16 %v393
        %v1111 = vunpack.c.l.b16 %v394
        %v1112 = vunpack.c.h.b16 %v394
        %v1113 = vunpack.c.l.b16 %v395
        %v1114 = vunpack.c.h.b16 %v395
        %v1115 = vunpack.c.l.b16 %v396
        %v1116 = vunpack.c.h.b16 %v396
        %v1117 = vunpack.c.l.b16 %v397
        %v1118 = vunpack.c.h.b16 %v397
        %v1119 = vunpack.c.l.b16 %v398
        %v1120 = vunpack.c.h.b16 %v398
        %v1121 = vunpack.c.l.b16 %v399
        %v1122 = vunpack.c.h.b16 %v399
        %v1123 = vunpack.c.l.b16 %v400
        %v1124 = vunpack.c.h.b16 %v400
        %v1125 = vunpack.c.l.b16 %v401
        %v1126 = vunpack.c.h.b16 %v401
        %v1127 = vunpack.c.l.b16 %v402
        %v1128 = vunpack.c.h.b16 %v402
        %v1129 = vunpack.c.l.b16 %v403
        %v1130 = vunpack.c.h.b16 %v403
        %v1131 = vunpack.c.l.b16 %v404
        %v1132 = vunpack.c.h.b16 %v404
        %v1133 = vunpack.c.l.b16 %v405
        %v1134 = vunpack.c.h.b16 %v405
        %v1135 = vunpack.c.l.b16 %v406
        %v1136 = vunpack.c.h.b16 %v406
        %v1137 = vunpack.c.l.b16 %v407
        %v1138 = vunpack.c.h.b16 %v407
        %v1139 = vunpack.c.l.b16 %v408
        %v1140 = vunpack.c.h.b16 %v408
        %v1141 = vunpack.c.l.b16 %v409
        %v1142 = vunpack.c.h.b16 %v409
        %v1143 = vunpack.c.l.b16 %v410
        %v1144 = vunpack.c.h.b16 %v410
        %v1145 = vunpack.c.l.b16 %v411
        %v1146 = vunpack.c.h.b16 %v411
        %v1147 = vunpack.c.l.b16 %v412
        %v1148 = vunpack.c.h.b16 %v412
        %v1149 = vunpack.c.l.b16 %v413
        %v1150 = vunpack.c.h.b16 %v413
        %v1151 = vunpack.c.l.b16 %v414
        %v1152 = vunpack.c.h.b16 %v414
        %v1153 = vunpack.c.l.b16 %v415
        %v1154 = vunpack.c.h.b16 %v415
        %v1155 = vunpack.c.l.b16 %v416
        %v1156 = vunpack.c.h.b16 %v416
        %v1157 = vunpack.c.l.b16 %v417
        %v1158 = vunpack.c.h.b16 %v417
        %v1159 = vunpack.c.l.b16 %v418
        %v1160 = vunpack.c.h.b16 %v418
        %v1161 = vunpack.c.l.b16 %v419
        %v1162 = vunpack.c.h.b16 %v419
        %v1163 = vunpack.c.l.b16 %v420
        %v1164 = vunpack.c.h.b16 %v420
        %v1165 = vunpack.c.l.b16 %v421
        %v1166 = vunpack.c.h.b16 %v421
        %v1167 = vunpack.c.l.b16 %v422
        %v1168 = vunpack.c.h.b16 %v422
        %v1169 = vunpack.c.l.b16 %v423
        %v1170 = vunpack.c.h.b16 %v423
        %v1171 = vunpack.c.l.b16 %v424
        %v1172 = vunpack.c.h.b16 %v424
        %v1173 = vunpack.c.l.b16 %v425
        %v1174 = vunpack.c.h.b16 %v425
        %v1175 = vunpack.c.l.b16 %v426
        %v1176 = vunpack.c.h.b16 %v426
        %v1177 = vunpack.c.l.b16 %v427
        %v1178 = vunpack.c.h.b16 %v427
        %v1179 = vunpack.c.l.b16 %v428
        %v1180 = vunpack.c.h.b16 %v428
        %v1181 = vunpack.c.l.b16 %v429
        %v1182 = vunpack.c.h.b16 %v429
        %v1183 = vunpack.c.l.b16 %v430
        %v1184 = vunpack.c.h.b16 %v430
        %v1185 = vunpack.c.l.b16 %v431
        %v1186 = vunpack.c.h.b16 %v431
        %v1187 = vunpack.c.l.b16 %v432
        %v1188 = vunpack.c.h.b16 %v432
        %v1189 = vunpack.c.l.b16 %v433
        %v1190 = vunpack.c.h.b16 %v433
        %v1191 = vunpack.c.l.b16 %v434
        %v1192 = vunpack.c.h.b16 %v434
        %v1193 = vunpack.c.l.b16 %v435
        %v1194 = vunpack.c.h.b16 %v435
        %v1195 = vunpack.c.l.b16 %v436
        %v1196 = vunpack.c.h.b16 %v436
        %v1197 = vunpack.c.l.b16 %v437
        %v1198 = vunpack.c.h.b16 %v437
        %v1199 = vunpack.c.l.b16 %v438
        %v1200 = vunpack.c.h.b16 %v438
        %v1201 = vunpack.c.l.b16 %v439
        %v1202 = vunpack.c.h.b16 %v439
        %v1203 = vunpack.c.l.b16 %v440
        %v1204 = vunpack.c.h.b16 %v440
        %v1205 = vunpack.c.l.b16 %v441
        %v1206 = vunpack.c.h.b16 %v441
        %v1207 = vunpack.c.l.b16 %v442
        %v1208 = vunpack.c.h.b16 %v442
        %v1209 = vunpack.c.l.b16 %v443
        %v1210 = vunpack.c.h.b16 %v443
        %v1211 = vunpack.c.l.b16 %v444
        %v1212 = vunpack.c.h.b16 %v444
        %v1213 = vunpack.c.l.b16 %v445
        %v1214 = vunpack.c.h.b16 %v445
        %v1215 = vunpack.c.l.b16 %v446
        %v1216 = vunpack.c.h.b16 %v446
        %v1217 = vunpack.c.l.b16 %v447
        %v1218 = vunpack.c.h.b16 %v447
        %v1219 = vunpack.c.l.b16 %v448
        %v1220 = vunpack.c.h.b16 %v448
        %v1221 = vunpack.c.l.b16 %v449
        %v1222 = vunpack.c.h.b16 %v449
        %v1223 = vunpack.c.l.b16 %v450
        %v1224 = vunpack.c.h.b16 %v450
        %v1225 = vunpack.c.l.b16 %v451
        %v1226 = vunpack.c.h.b16 %v451
        %v1227 = vunpack.c.l.b16 %v452
        %v1228 = vunpack.c.h.b16 %v452
        %v1229 = vunpack.c.l.b16 %v453
        %v1230 = vunpack.c.h.b16 %v453
        %v1231 = vunpack.c.l.b16 %v454
        %v1232 = vunpack.c.h.b16 %v454
        %v1233 = vunpack.c.l.b16 %v455
        %v1234 = vunpack.c.h.b16 %v455
        %v1235 = vunpack.c.l.b16 %v456
        %v1236 = vunpack.c.h.b16 %v456
        %v1237 = vunpack.c.l.b16 %v457
        %v1238 = vunpack.c.h.b16 %v457
        %v1239 = vunpack.c.l.b16 %v458
        %v1240 = vunpack.c.h.b16 %v458
        %v1241 = vunpack.c.l.b16 %v459
        %v1242 = vunpack.c.h.b16 %v459
        %v1243 = vunpack.c.l.b16 %v460
        %v1244 = vunpack.c.h.b16 %v460
        %v1245 = vunpack.c.l.b16 %v461
        %v1246 = vunpack.c.h.b16 %v461
        %v1247 = vunpack.c.l.b16 %v462
        %v1248 = vunpack.c.h.b16 %v462
        %v1249 = vunpack.c.l.b16 %v463
        %v1250 = vunpack.c.h.b16 %v463
        %v1251 = vunpack.c.l.b16 %v464
        %v1252 = vunpack.c.h.b16 %v464
        %v1253 = vunpack.c.l.b16 %v465
        %v1254 = vunpack.c.h.b16 %v465
        %v1255 = vunpack.c.l.b16 %v466
        %v1256 = vunpack.c.h.b16 %v466
        %v1257 = vunpack.c.l.b16 %v467
        %v1258 = vunpack.c.h.b16 %v467
        %v1259 = vunpack.c.l.b16 %v468
        %v1260 = vunpack.c.h.b16 %v468
        %v1261 = vunpack.c.l.b16 %v469
        %v1262 = vunpack.c.h.b16 %v469
        %v1263 = vunpack.c.l.b16 %v470
        %v1264 = vunpack.c.h.b16 %v470
        %v1265 = vunpack.c.l.b16 %v471
        %v1266 = vunpack.c.h.b16 %v471
        %v1267 = vunpack.c.l.b16 %v472
        %v1268 = vunpack.c.h.b16 %v472
        %v1269 = vunpack.c.l.b16 %v473
        %v1270 = vunpack.c.h.b16 %v473
        %v1271 = vunpack.c.l.b16 %v474
        %v1272 = vunpack.c.h.b16 %v474
        %v1273 = vunpack.c.l.b16 %v475
        %v1274 = vunpack.c.h.b16 %v475
        %v1275 = vunpack.c.l.b16 %v476
        %v1276 = vunpack.c.h.b16 %v476
        %v1277 = vunpack.c.l.b16 %v477
        %v1278 = vunpack.c.h.b16 %v477
        %v1279 = vunpack.c.l.b16 %v478
        %v1280 = vunpack.c.h.b16 %v478
        %v1281 = vunpack.c.l.b16 %v479
        %v1282 = vunpack.c.h.b16 %v479
        %v1283 = vunpack.c.l.b16 %v480
        %v1284 = vunpack.c.h.b16 %v480
        %v1285 = vunpack.c.l.b16 %v481
        %v1286 = vunpack.c.h.b16 %v481
        %v1287 = vunpack.c.l.b16 %v482
        %v1288 = vunpack.c.h.b16 %v482
        %v1289 = vunpack.c.l.b16 %v483
        %v1290 = vunpack.c.h.b16 %v483
        %v1291 = vunpack.c.l.b16 %v484
        %v1292 = vunpack.c.h.b16 %v484
        %v1293 = vunpack.c.l.b16 %v485
        %v1294 = vunpack.c.h.b16 %v485
        %v1295 = vunpack.c.l.b16 %v486
        %v1296 = vunpack.c.h.b16 %v486
        %v1297 = vunpack.c.l.b16 %v487
        %v1298 = vunpack.c.h.b16 %v487
        %v1299 = vunpack.c.l.b16 %v488
        %v1300 = vunpack.c.h.b16 %v488
        %v1301 = vunpack.c.l.b16 %v489
        %v1302 = vunpack.c.h.b16 %v489
        %v1303 = vunpack.c.l.b16 %v490
        %v1304 = vunpack.c.h.b16 %v490
        %v1305 = vunpack.c.l.b16 %v491
        %v1306 = vunpack.c.h.b16 %v491
        %v1307 = vunpack.c.l.b16 %v492
        %v1308 = vunpack.c.h.b16 %v492
        %v1309 = vunpack.c.l.b16 %v493
        %v1310 = vunpack.c.h.b16 %v493
        %v1311 = vunpack.c.l.b16 %v494
        %v1312 = vunpack.c.h.b16 %v494
        %v1313 = vunpack.c.l.b16 %v495
        %v1314 = vunpack.c.h.b16 %v495
        %v1315 = vunpack.c.l.b16 %v496
        %v1316 = vunpack.c.h.b16 %v496
        %v1317 = vunpack.c.l.b16 %v497
        %v1318 = vunpack.c.h.b16 %v497
        %v1319 = vunpack.c.l.b16 %v498
        %v1320 = vunpack.c.h.b16 %v498
        %v1321 = vunpack.c.l.b16 %v499
        %v1322 = vunpack.c.h.b16 %v499
        %v1323 = vunpack.c.l.b16 %v500
        %v1324 = vunpack.c.h.b16 %v500
        %v1325 = vunpack.c.l.b16 %v501
        %v1326 = vunpack.c.h.b16 %v501
        %v1327 = vunpack.c.l.b16 %v502
        %v1328 = vunpack.c.h.b16 %v502
        %v1329 = vunpack.c.l.b16 %v503
        %v1330 = vunpack.c.h.b16 %v503
        %v1331 = vunpack.c.l.b16 %v504
        %v1332 = vunpack.c.h.b16 %v504
        %v1333 = vunpack.c.l.b16 %v505
        %v1334 = vunpack.c.h.b16 %v505
        %v1335 = vunpack.c.l.b16 %v506
        %v1336 = vunpack.c.h.b16 %v506
        %v1337 = vunpack.c.l.b16 %v507
        %v1338 = vunpack.c.h.b16 %v507
        %v1339 = vunpack.c.l.b16 %v508
        %v1340 = vunpack.c.h.b16 %v508
        %v1341 = vunpack.c.l.b16 %v509
        %v1342 = vunpack.c.h.b16 %v509
        %v1343 = vunpack.c.l.b16 %v510
        %v1344 = vunpack.c.h.b16 %v510
        %v1345 = vunpack.c.l.b16 %v511
        %v1346 = vunpack.c.h.b16 %v511
        %v1347 = vunpack.c.l.b16 %v512
        %v1348 = vunpack.c.h.b16 %v512
        %v1349 = vunpack.c.l.b16 %v513
        %v1350 = vunpack.c.h.b16 %v513
        %v1351 = vunpack.c.l.b16 %v514
        %v1352 = vunpack.c.h.b16 %v514
        %v1353 = vunpack.c.l.b16 %v515
        %v1354 = vunpack.c.h.b16 %v515
        %v1355 = vunpack.c.l.b16 %v516
        %v1356 = vunpack.c.h.b16 %v516
        %v1357 = vunpack.c.l.b16 %v517
        %v1358 = vunpack.c.h.b16 %v517
        %v1359 = vunpack.c.l.b16 %v518
        %v1360 = vunpack.c.h.b16 %v518
        %v1361 = vunpack.c.l.b16 %v519
        %v1362 = vunpack.c.h.b16 %v519
        %v1363 = vunpack.c.l.b16 %v520
        %v1364 = vunpack.c.h.b16 %v520
        %v1365 = vunpack.c.l.b16 %v521
        %v1366 = vunpack.c.h.b16 %v521
        %v1367 = vunpack.c.l.b16 %v522
        %v1368 = vunpack.c.h.b16 %v522
        %v1369 = vunpack.c.l.b16 %v523
        %v1370 = vunpack.c.h.b16 %v523
        %v1371 = vunpack.c.l.b16 %v524
        %v1372 = vunpack.c.h.b16 %v524
        %v1373 = vunpack.c.l.b16 %v525
        %v1374 = vunpack.c.h.b16 %v525
        %v1375 = vunpack.c.l.b16 %v526
        %v1376 = vunpack.c.h.b16 %v526
        %v1377 = vunpack.c.l.b16 %v527
        %v1378 = vunpack.c.h.b16 %v527
        %v1379 = vunpack.c.l.b16 %v528
        %v1380 = vunpack.c.h.b16 %v528
        %v1381 = vunpack.c.l.b16 %v529
        %v1382 = vunpack.c.h.b16 %v529
        %v1383 = vunpack.c.l.b16 %v530
        %v1384 = vunpack.c.h.b16 %v530
        %v1385 = vunpack.c.l.b16 %v531
        %v1386 = vunpack.c.h.b16 %v531
        %v1387 = vunpack.c.l.b16 %v532
        %v1388 = vunpack.c.h.b16 %v532
        %v1389 = vunpack.c.l.b16 %v533
        %v1390 = vunpack.c.h.b16 %v533
        %v1391 = vunpack.c.l.b16 %v534
        %v1392 = vunpack.c.h.b16 %v534
        %v1393 = vunpack.c.l.b16 %v535
        %v1394 = vunpack.c.h.b16 %v535
        %v1395 = vunpack.c.l.b16 %v536
        %v1396 = vunpack.c.h.b16 %v536
        %v1397 = vunpack.c.l.b16 %v537
        %v1398 = vunpack.c.h.b16 %v537
        %v1399 = vunpack.c.l.b16 %v538
        %v1400 = vunpack.c.h.b16 %v538
        %v1401 = vunpack.c.l.b16 %v539
        %v1402 = vunpack.c.h.b16 %v539
        %v1403 = vunpack.c.l.b16 %v540
        %v1404 = vunpack.c.h.b16 %v540
        %v1405 = vunpack.c.l.b16 %v541
        %v1406 = vunpack.c.h.b16 %v541
        %v1407 = vunpack.c.l.b16 %v542
        %v1408 = vunpack.c.h.b16 %v542
        %v1409 = vunpack.c.l.b16 %v543
        %v1410 = vunpack.c.h.b16 %v543
        %v1411 = vunpack.c.l.b16 %v544
        %v1412 = vunpack.c.h.b16 %v544
        %v1413 = vunpack.c.l.b16 %v545
        %v1414 = vunpack.c.h.b16 %v545
        %v1415 = vunpack.c.l.b16 %v546
        %v1416 = vunpack.c.h.b16 %v546
        %v1417 = vunpack.c.l.b16 %v547
        %v1418 = vunpack.c.h.b16 %v547
        %v1419 = vunpack.c.l.b16 %v548
        %v1420 = vunpack.c.h.b16 %v548
        %v1421 = vunpack.c.l.b16 %v549
        %v1422 = vunpack.c.h.b16 %v549
        %v1423 = vunpack.c.l.b16 %v550
        %v1424 = vunpack.c.h.b16 %v550
        %v1425 = vunpack.c.l.b16 %v551
        %v1426 = vunpack.c.h.b16 %v551
        %v1427 = vunpack.c.l.b16 %v552
        %v1428 = vunpack.c.h.b16 %v552
        %v1429 = vunpack.c.l.b16 %v553
        %v1430 = vunpack.c.h.b16 %v553
        %v1431 = vunpack.c.l.b16 %v554
        %v1432 = vunpack.c.h.b16 %v554
        %v1433 = vunpack.c.l.b16 %v555
        %v1434 = vunpack.c.h.b16 %v555
        %v1435 = vunpack.c.l.b16 %v556
        %v1436 = vunpack.c.h.b16 %v556
        %v1437 = vunpack.c.l.b16 %v557
        %v1438 = vunpack.c.h.b16 %v557
        %v1439 = vunpack.c.l.b16 %v558
        %v1440 = vunpack.c.h.b16 %v558
        %v1441 = vunpack.c.l.b16 %v559
        %v1442 = vunpack.c.h.b16 %v559
        %v1443 = vunpack.c.l.b16 %v560
        %v1444 = vunpack.c.h.b16 %v560
        %v1445 = vunpack.c.l.b16 %v561
        %v1446 = vunpack.c.h.b16 %v561
        %v1447 = vunpack.c.l.b16 %v562
        %v1448 = vunpack.c.h.b16 %v562
        %v1449 = vunpack.c.l.b16 %v563
        %v1450 = vunpack.c.h.b16 %v563
        %v1451 = vunpack.c.l.b16 %v564
        %v1452 = vunpack.c.h.b16 %v564
        %v1453 = vunpack.c.l.b16 %v565
        %v1454 = vunpack.c.h.b16 %v565
        %v1455 = vunpack.c.l.b16 %v566
        %v1456 = vunpack.c.h.b16 %v566
        %v1457 = vunpack.c.l.b16 %v567
        %v1458 = vunpack.c.h.b16 %v567
        %v1459 = vunpack.c.l.b16 %v568
        %v1460 = vunpack.c.h.b16 %v568
        %v1461 = vunpack.c.l.b16 %v569
        %v1462 = vunpack.c.h.b16 %v569
        %v1463 = vunpack.c.l.b16 %v570
        %v1464 = vunpack.c.h.b16 %v570
        %v1465 = vunpack.c.l.b16 %v571
        %v1466 = vunpack.c.h.b16 %v571
        %v1467 = vunpack.c.l.b16 %v572
        %v1468 = vunpack.c.h.b16 %v572
        %v1469 = vunpack.c.l.b16 %v573
        %v1470 = vunpack.c.h.b16 %v573
        %v1471 = vunpack.c.l.b16 %v574
        %v1472 = vunpack.c.h.b16 %v574
        %v1473 = vunpack.c.l.b16 %v575
        %v1474 = vunpack.c.h.b16 %v575
        %v1475 = vunpack.c.l.b16 %v576
        %v1476 = vunpack.c.h.b16 %v576
        %v1477 = vunpack.c.l.b16 %v577
        %v1478 = vunpack.c.h.b16 %v577
        %v1479 = vunpack.c.l.b16 %v578
        %v1480 = vunpack.c.h.b16 %v578
        %v1481 = vunpack.c.l.b16 %v579
        %v1482 = vunpack.c.h.b16 %v579
        %v1483 = vunpack.c.l.b16 %v580
        %v1484 = vunpack.c.h.b16 %v580
        %v1485 = vunpack.c.l.b16 %v581
        %v1486 = vunpack.c.h.b16 %v581
        %v1487 = vunpack.c.l.b16 %v582
        %v1488 = vunpack.c.h.b16 %v582
        %v1489 = vunpack.c.l.b16 %v583
        %v1490 = vunpack.c.h.b16 %v583
        %v1491 = vunpack.c.l.b16 %v584
        %v1492 = vunpack.c.h.b16 %v584
        %v1493 = vunpack.c.l.b16 %v585
        %v1494 = vunpack.c.h.b16 %v585
        %v1495 = vunpack.c.l.b16 %v586
        %v1496 = vunpack.c.h.b16 %v586
        %v1497 = vunpack.c.l.b16 %v587
        %v1498 = vunpack.c.h.b16 %v587
        %v1499 = vunpack.c.l.b16 %v588
        %v1500 = vunpack.c.h.b16 %v588
        %v1501 = vunpack.c.l.b16 %v589
        %v1502 = vunpack.c.h.b16 %v589
        %v1503 = vunpack.c.l.b16 %v590
        %v1504 = vunpack.c.h.b16 %v590
        %v1505 = vunpack.c.l.b16 %v591
        %v1506 = vunpack.c.h.b16 %v591
        %v1507 = vunpack.c.l.b16 %v592
        %v1508 = vunpack.c.h.b16 %v592
        %v1509 = vunpack.c.l.b16 %v593
        %v1510 = vunpack.c.h.b16 %v593
        %v1511 = vunpack.c.l.b16 %v594
        %v1512 = vunpack.c.h.b16 %v594
        %v1513 = vunpack.c.l.b16 %v595
        %v1514 = vunpack.c.h.b16 %v595
        %v1515 = vunpack.c.l.b16 %v596
        %v1516 = vunpack.c.h.b16 %v596
        %v1517 = vunpack.c.l.b16 %v597
        %v1518 = vunpack.c.h.b16 %v597
        %v1519 = vunpack.c.l.b16 %v598
        %v1520 = vunpack.c.h.b16 %v598
        %v1521 = vunpack.c.l.b16 %v599
        %v1522 = vunpack.c.h.b16 %v599
        %v1523 = vunpack.c.l.b16 %v600
        %v1524 = vunpack.c.h.b16 %v600
        %v1525 = vunpack.c.l.b16 %v601
        %v1526 = vunpack.c.h.b16 %v601
        %v1527 = vunpack.c.l.b16 %v602
        %v1528 = vunpack.c.h.b16 %v602
        %v1529 = vunpack.c.l.b16 %v603
        %v1530 = vunpack.c.h.b16 %v603
        %v1531 = vunpack.c.l.b16 %v604
        %v1532 = vunpack.c.h.b16 %v604
        %v1533 = vpack.c.b16 %v1025, %v1021
        %v1534 = vpack.c.b16 %v1026, %v1022
        %v1535 = vpack.c.b16 %v1027, %v1023
        %v1536 = vpack.c.b16 %v1028, %v1024
        %v1537 = vpack.c.b16 %v1033, %v1029
        %v1538 = vpack.c.b16 %v1034, %v1030
        %v1539 = vpack.c.b16 %v1035, %v1031
        %v1540 = vpack.c.b16 %v1036, %v1032
        %v1541 = vpack.c.b16 %v1041, %v1037
        %v1542 = vpack.c.b16 %v1042, %v1038
        %v1543 = vpack.c.b16 %v1043, %v1039
        %v1544 = vpack.c.b16 %v1044, %v1040
        %v1545 = vpack.c.b16 %v1049, %v1045
        %v1546 = vpack.c.b16 %v1050, %v1046
        %v1547 = vpack.c.b16 %v1051, %v1047
        %v1548 = vpack.c.b16 %v1052, %v1048
        %v1549 = vpack.c.b16 %v1057, %v1053
        %v1550 = vpack.c.b16 %v1058, %v1054
        %v1551 = vpack.c.b16 %v1059, %v1055
        %v1552 = vpack.c.b16 %v1060, %v1056
        %v1553 = vpack.c.b16 %v1065, %v1061
        %v1554 = vpack.c.b16 %v1066, %v1062
        %v1555 = vpack.c.b16 %v1067, %v1063
        %v1556 = vpack.c.b16 %v1068, %v1064
        %v1557 = vpack.c.b16 %v1073, %v1069
        %v1558 = vpack.c.b16 %v1074, %v1070
        %v1559 = vpack.c.b16 %v1075, %v1071
        %v1560 = vpack.c.b16 %v1076, %v1072
        %v1561 = vpack.c.b16 %v1081, %v1077
        %v1562 = vpack.c.b16 %v1082, %v1078
        %v1563 = vpack.c.b16 %v1083, %v1079
        %v1564 = vpack.c.b16 %v1084, %v1080
        %v1565 = vpack.c.b16 %v1089, %v1085
        %v1566 = vpack.c.b16 %v1090, %v1086
        %v1567 = vpack.c.b16 %v1091, %v1087
        %v1568 = vpack.c.b16 %v1092, %v1088
        %v1569 = vpack.c.b16 %v1097, %v1093
        %v1570 = vpack.c.b16 %v1098, %v1094
        %v1571 = vpack.c.b16 %v1099, %v1095
        %v1572 = vpack.c.b16 %v1100, %v1096
        %v1573 = vpack.c.b16 %v1105, %v1101
        %v1574 = vpack.c.b16 %v1106, %v1102
        %v1575 = vpack.c.b16 %v1107, %v1103
        %v1576 = vpack.c.b16 %v1108, %v1104
        %v1577 = vpack.c.b16 %v1113, %v1109
        %v1578 = vpack.c.b16 %v1114, %v1110
        %v1579 = vpack.c.b16 %v1115, %v1111
        %v1580 = vpack.c.b16 %v1116, %v1112
        %v1581 = vpack.c.b16 %v1121, %v1117
        %v1582 = vpack.c.b16 %v1122, %v1118
        %v1583 = vpack.c.b16 %v1123, %v1119
        %v1584 = vpack.c.b16 %v1124, %v1120
        %v1585 = vpack.c.b16 %v1129, %v1125
        %v1586 = vpack.c.b16 %v1130, %v1126
        %v1587 = vpack.c.b16 %v1131, %v1127
        %v1588 = vpack.c.b16 %v1132, %v1128
        %v1589 = vpack.c.b16 %v1137, %v1133
        %v1590 = vpack.c.b16 %v1138, %v1134
        %v1591 = vpack.c.b16 %v1139, %v1135
        %v1592 = vpack.c.b16 %v1140, %v1136
        %v1593 = vpack.c.b16 %v1145, %v1141
        %v1594 = vpack.c.b16 %v1146, %v1142
        %v1595 = vpack.c.b16 %v1147, %v1143
        %v1596 = vpack.c.b16 %v1148, %v1144
        %v1597 = vpack.c.b16 %v1153, %v1149
        %v1598 = vpack.c.b16 %v1154, %v1150
        %v1599 = vpack.c.b16 %v1155, %v1151
        %v1600 = vpack.c.b16 %v1156, %v1152
        %v1601 = vpack.c.b16 %v1161, %v1157
        %v1602 = vpack.c.b16 %v1162, %v1158
        %v1603 = vpack.c.b16 %v1163, %v1159
        %v1604 = vpack.c.b16 %v1164, %v1160
        %v1605 = vpack.c.b16 %v1169, %v1165
        %v1606 = vpack.c.b16 %v1170, %v1166
        %v1607 = vpack.c.b16 %v1171, %v1167
        %v1608 = vpack.c.b16 %v1172, %v1168
        %v1609 = vpack.c.b16 %v1177, %v1173
        %v1610 = vpack.c.b16 %v1178, %v1174
        %v1611 = vpack.c.b16 %v1179, %v1175
        %v1612 = vpack.c.b16 %v1180, %v1176
        %v1613 = vpack.c.b16 %v1185, %v1181
        %v1614 = vpack.c.b16 %v1186, %v1182
        %v1615 = vpack.c.b16 %v1187, %v1183
        %v1616 = vpack.c.b16 %v1188, %v1184
        %v1617 = vpack.c.b16 %v1193, %v1189
        %v1618 = vpack.c.b16 %v1194, %v1190
        %v1619 = vpack.c.b16 %v1195, %v1191
        %v1620 = vpack.c.b16 %v1196, %v1192
        %v1621 = vpack.c.b16 %v1201, %v1197
        %v1622 = vpack.c.b16 %v1202, %v1198
        %v1623 = vpack.c.b16 %v1203, %v1199
        %v1624 = vpack.c.b16 %v1204, %v1200
        %v1625 = vpack.c.b16 %v1209, %v1205
        %v1626 = vpack.c.b16 %v1210, %v1206
        %v1627 = vpack.c.b16 %v1211, %v1207
        %v1628 = vpack.c.b16 %v1212, %v1208
        %v1629 = vpack.c.b16 %v1217, %v1213
        %v1630 = vpack.c.b16 %v1218, %v1214
        %v1631 = vpack.c.b16 %v1219, %v1215
        %v1632 = vpack.c.b16 %v1220, %v1216
        %v1633 = vpack.c.b16 %v1225, %v1221
        %v1634 = vpack.c.b16 %v1226, %v1222
        %v1635 = vpack.c.b16 %v1227, %v1223
        %v1636 = vpack.c.b16 %v1228, %v1224
        %v1637 = vpack.c.b16 %v1233, %v1229
        %v1638 = vpack.c.b16 %v1234, %v1230
        %v1639 = vpack.c.b16 %v1235, %v1231
        %v1640 = vpack.c.b16 %v1236, %v1232
        %v1641 = vpack.c.b16 %v1241, %v1237
        %v1642 = vpack.c.b16 %v1242, %v1238
        %v1643 = vpack.c.b16 %v1243, %v1239
        %v1644 = vpack.c.b16 %v1244, %v1240
        %v1645 = vpack.c.b16 %v1249, %v1245
        %v1646 = vpack.c.b16 %v1250, %v1246
        %v1647 = vpack.c.b16 %v1251, %v1247
        %v1648 = vpack.c.b16 %v1252, %v1248
        %v1649 = vpack.c.b16 %v1257, %v1253
        %v1650 = vpack.c.b16 %v1258, %v1254
        %v1651 = vpack.c.b16 %v1259, %v1255
        %v1652 = vpack.c.b16 %v1260, %v1256
        %v1653 = vpack.c.b16 %v1265, %v1261
        %v1654 = vpack.c.b16 %v1266, %v1262
        %v1655 = vpack.c.b16 %v1267, %v1263
        %v1656 = vpack.c.b16 %v1268, %v1264
        %v1657 = vpack.c.b16 %v1273, %v1269
        %v1658 = vpack.c.b16 %v1274, %v1270
        %v1659 = vpack.c.b16 %v1275, %v1271
        %v1660 = vpack.c.b16 %v1276, %v1272
        %v1661 = vpack.c.b16 %v1281, %v1277
        %v1662 = vpack.c.b16 %v1282, %v1278
        %v1663 = vpack.c.b16 %v1283, %v1279
        %v1664 = vpack.c.b16 %v1284, %v1280
        %v1665 = vpack.c.b16 %v1289, %v1285
        %v1666 = vpack.c.b16 %v1290, %v1286
        %v1667 = vpack.c.b16 %v1291, %v1287
        %v1668 = vpack.c.b16 %v1292, %v1288
        %v1669 = vpack.c.b16 %v1297, %v1293
        %v1670 = vpack.c.b16 %v1298, %v1294
        %v1671 = vpack.c.b16 %v1299, %v1295
        %v1672 = vpack.c.b16 %v1300, %v1296
        %v1673 = vpack.c.b16 %v1305, %v1301
        %v1674 = vpack.c.b16 %v1306, %v1302
        %v1675 = vpack.c.b16 %v1307, %v1303
        %v1676 = vpack.c.b16 %v1308, %v1304
        %v1677 = vpack.c.b16 %v1313, %v1309
        %v1678 = vpack.c.b16 %v1314, %v1310
        %v1679 = vpack.c.b16 %v1315, %v1311
        %v1680 = vpack.c.b16 %v1316, %v1312
        %v1681 = vpack.c.b16 %v1321, %v1317
        %v1682 = vpack.c.b16 %v1322, %v1318
        %v1683 = vpack.c.b16 %v1323, %v1319
        %v1684 = vpack.c.b16 %v1324, %v1320
        %v1685 = vpack.c.b16 %v1329, %v1325
        %v1686 = vpack.c.b16 %v1330, %v1326
        %v1687 = vpack.c.b16 %v1331, %v1327
        %v1688 = vpack.c.b16 %v1332, %v1328
        %v1689 = vpack.c.b16 %v1337, %v1333
        %v1690 = vpack.c.b16 %v1338, %v1334
        %v1691 = vpack.c.b16 %v1339, %v1335
        %v1692 = vpack.c.b16 %v1340, %v1336
        %v1693 = vpack.c.b16 %v1345, %v1341
        %v1694 = vpack.c.b16 %v1346, %v1342
        %v1695 = vpack.c.b16 %v1347, %v1343
        %v1696 = vpack.c.b16 %v1348, %v1344
        %v1697 = vpack.c.b16 %v1353, %v1349
        %v1698 = vpack.c.b16 %v1354, %v1350
        %v1699 = vpack.c.b16 %v1355, %v1351
        %v1700 = vpack.c.b16 %v1356, %v1352
        %v1701 = vpack.c.b16 %v1361, %v1357
        %v1702 = vpack.c.b16 %v1362, %v1358
        %v1703 = vpack.c.b16 %v1363, %v1359
        %v1704 = vpack.c.b16 %v1364, %v1360
        %v1705 = vpack.c.b16 %v1369, %v1365
        %v1706 = vpack.c.b16 %v1370, %v1366
        %v1707 = vpack.c.b16 %v1371, %v1367
        %v1708 = vpack.c.b16 %v1372, %v1368
        %v1709 = vpack.c.b16 %v1377, %v1373
        %v1710 = vpack.c.b16 %v1378, %v1374
        %v1711 = vpack.c.b16 %v1379, %v1375
        %v1712 = vpack.c.b16 %v1380, %v1376
        %v1713 = vpack.c.b16 %v1385, %v1381
        %v1714 = vpack.c.b16 %v1386, %v1382
        %v1715 = vpack.c.b16 %v1387, %v1383
        %v1716 = vpack.c.b16 %v1388, %v1384
        %v1717 = vpack.c.b16 %v1393, %v1389
        %v1718 = vpack.c.b16 %v1394, %v1390
        %v1719 = vpack.c.b16 %v1395, %v1391
        %v1720 = vpack.c.b16 %v1396, %v1392
        %v1721 = vpack.c.b16 %v1401, %v1397
        %v1722 = vpack.c.b16 %v1402, %v1398
        %v1723 = vpack.c.b16 %v1403, %v1399
        %v1724 = vpack.c.b16 %v1404, %v1400
        %v1725 = vpack.c.b16 %v1409, %v1405
        %v1726 = vpack.c.b16 %v1410, %v1406
        %v1727 = vpack.c.b16 %v1411, %v1407
        %v1728 = vpack.c.b16 %v1412, %v1408
        %v1729 = vpack.c.b16 %v1417, %v1413
        %v1730 = vpack.c.b16 %v1418, %v1414
        %v1731 = vpack.c.b16 %v1419, %v1415
        %v1732 = vpack.c.b16 %v1420, %v1416
        %v1733 = vpack.c.b16 %v1425, %v1421
        %v1734 = vpack.c.b16 %v1426, %v1422
        %v1735 = vpack.c.b16 %v1427, %v1423
        %v1736 = vpack.c.b16 %v1428, %v1424
        %v1737 = vpack.c.b16 %v1433, %v1429
        %v1738 = vpack.c.b16 %v1434, %v1430
        %v1739 = vpack.c.b16 %v1435, %v1431
        %v1740 = vpack.c.b16 %v1436, %v1432
        %v1741 = vpack.c.b16 %v1441, %v1437
        %v1742 = vpack.c.b16 %v1442, %v1438
        %v1743 = vpack.c.b16 %v1443, %v1439
        %v1744 = vpack.c.b16 %v1444, %v1440
        %v1745 = vpack.c.b16 %v1449, %v1445
        %v1746 = vpack.c.b16 %v1450, %v1446
        %v1747 = vpack.c.b16 %v1451, %v1447
        %v1748 = vpack.c.b16 %v1452, %v1448
        %v1749 = vpack.c.b16 %v1457, %v1453
        %v1750 = vpack.c.b16 %v1458, %v1454
        %v1751 = vpack.c.b16 %v1459, %v1455
        %v1752 = vpack.c.b16 %v1460, %v1456
        %v1753 = vpack.c.b16 %v1465, %v1461
        %v1754 = vpack.c.b16 %v1466, %v1462
        %v1755 = vpack.c.b16 %v1467, %v1463
        %v1756 = vpack.c.b16 %v1468, %v1464
        %v1757 = vpack.c.b16 %v1473, %v1469
        %v1758 = vpack.c.b16 %v1474, %v1470
        %v1759 = vpack.c.b16 %v1475, %v1471
        %v1760 = vpack.c.b16 %v1476, %v1472
        %v1761 = vpack.c.b16 %v1481, %v1477
        %v1762 = vpack.c.b16 %v1482, %v1478
        %v1763 = vpack.c.b16 %v1483, %v1479
        %v1764 = vpack.c.b16 %v1484, %v1480
        %v1765 = vpack.c.b16 %v1489, %v1485
        %v1766 = vpack.c.b16 %v1490, %v1486
        %v1767 = vpack.c.b16 %v1491, %v1487
        %v1768 = vpack.c.b16 %v1492, %v1488
        %v1769 = vpack.c.b16 %v1497, %v1493
        %v1770 = vpack.c.b16 %v1498, %v1494
        %v1771 = vpack.c.b16 %v1499, %v1495
        %v1772 = vpack.c.b16 %v1500, %v1496
        %v1773 = vpack.c.b16 %v1505, %v1501
        %v1774 = vpack.c.b16 %v1506, %v1502
        %v1775 = vpack.c.b16 %v1507, %v1503
        %v1776 = vpack.c.b16 %v1508, %v1504
        %v1777 = vpack.c.b16 %v1513, %v1509
        %v1778 = vpack.c.b16 %v1514, %v1510
        %v1779 = vpack.c.b16 %v1515, %v1511
        %v1780 = vpack.c.b16 %v1516, %v1512
        %v1781 = vpack.c.b16 %v1521, %v1517
        %v1782 = vpack.c.b16 %v1522, %v1518
        %v1783 = vpack.c.b16 %v1523, %v1519
        %v1784 = vpack.c.b16 %v1524, %v1520
        %v1785 = vpack.c.b16 %v1529, %v1525
        %v1786 = vpack.c.b16 %v1530, %v1526
        %v1787 = vpack.c.b16 %v1531, %v1527
        %v1788 = vpack.c.b16 %v1532, %v1528
        %2045 = vmatpush.bf16.msra.mxu0 %v1561
        %2046 = vmatpush.bf16.msra.mxu0 %v1557
        %2047 = vmatpush.bf16.msra.mxu0 %v1553
        %2048 = vmatpush.bf16.msra.mxu0 %v1549
        %2049 = vmatpush.bf16.msra.mxu0 %v1545
        %2050 = vmatpush.bf16.msra.mxu0 %v1541
        %2051 = vmatpush.bf16.msra.mxu0 %v1537
        %2052 = vmatpush.bf16.msra.mxu0 %v1533
        %2053 = vmatmul.bf16.gmra.mxu0 %v701
        %v2054 = vpop.f32.mrf.mxu0
        %v2055 = vadd.f32 0.0, %v2054
        %v2056 = vpop.f32.mrf.mxu0
        %v2057 = vadd.f32 0.0, %v2056
        %2058 = vmatmul.bf16.gmra.mxu0 %v709
        %v2059 = vpop.f32.mrf.mxu0
        %v2060 = vadd.f32 0.0, %v2059
        %v2061 = vpop.f32.mrf.mxu0
        %v2062 = vadd.f32 0.0, %v2061
        %2063 = vmatmul.bf16.gmra.mxu0 %v717
        %v2064 = vpop.f32.mrf.mxu0
        %v2065 = vadd.f32 0.0, %v2064
        %v2066 = vpop.f32.mrf.mxu0
        %v2067 = vadd.f32 0.0, %v2066
        %2068 = vmatmul.bf16.gmra.mxu0 %v725
        %v2069 = vpop.f32.mrf.mxu0
        %v2070 = vpop.f32.mrf.mxu0
        %2071 = vdwg.mxu0
        %2072 = vmatpush.bf16.msra.mxu0 %v1593
        %2073 = vmatpush.bf16.msra.mxu0 %v1589
        %2074 = vmatpush.bf16.msra.mxu0 %v1585
        %2075 = vmatpush.bf16.msra.mxu0 %v1581
        %2076 = vmatpush.bf16.msra.mxu0 %v1577
        %2077 = vmatpush.bf16.msra.mxu0 %v1573
        %2078 = vmatpush.bf16.msra.mxu0 %v1569
        %2079 = vmatpush.bf16.msra.mxu0 %v1565
        %2080 = vmatmul.bf16.gmra.mxu0 %v702
        %v2081 = vpop.f32.mrf.mxu0
        %v2082 = vadd.f32 %v2055, %v2081
        %v2083 = vpop.f32.mrf.mxu0
        %v2084 = vadd.f32 %v2057, %v2083
        %2085 = vmatmul.bf16.gmra.mxu0 %v710
        %v2086 = vpop.f32.mrf.mxu0
        %v2087 = vadd.f32 %v2060, %v2086
        %v2088 = vpop.f32.mrf.mxu0
        %v2089 = vadd.f32 %v2062, %v2088
        %2090 = vmatmul.bf16.gmra.mxu0 %v718
        %v2091 = vpop.f32.mrf.mxu0
        %v2092 = vadd.f32 %v2065, %v2091
        %v2093 = vpop.f32.mrf.mxu0
        %v2094 = vadd.f32 %v2067, %v2093
        %2095 = vmatmul.bf16.gmra.mxu0 %v726
        %v2096 = vpop.f32.mrf.mxu0
        %v2097 = vpop.f32.mrf.mxu0
        %2098 = vdwg.mxu0
        %2099 = vmatpush.bf16.msra.mxu0 %v1625
        %2100 = vmatpush.bf16.msra.mxu0 %v1621
        %2101 = vmatpush.bf16.msra.mxu0 %v1617
        %2102 = vmatpush.bf16.msra.mxu0 %v1613
        %2103 = vmatpush.bf16.msra.mxu0 %v1609
        %2104 = vmatpush.bf16.msra.mxu0 %v1605
        %2105 = vmatpush.bf16.msra.mxu0 %v1601
        %2106 = vmatpush.bf16.msra.mxu0 %v1597
        %2107 = vmatmul.bf16.gmra.mxu0 %v703
        %v2108 = vpop.f32.mrf.mxu0
        %v2109 = vadd.f32 %v2082, %v2108
        %v2110 = vpop.f32.mrf.mxu0
        %v2111 = vadd.f32 %v2084, %v2110
        %2112 = vmatmul.bf16.gmra.mxu0 %v711
        %v2113 = vpop.f32.mrf.mxu0
        %v2114 = vadd.f32 %v2087, %v2113
        %v2115 = vpop.f32.mrf.mxu0
        %v2116 = vadd.f32 %v2089, %v2115
        %2117 = vmatmul.bf16.gmra.mxu0 %v719
        %v2118 = vpop.f32.mrf.mxu0
        %v2119 = vadd.f32 %v2092, %v2118
        %v2120 = vpop.f32.mrf.mxu0
        %v2121 = vadd.f32 %v2094, %v2120
        %2122 = vmatmul.bf16.gmra.mxu0 %v727
        %v2123 = vpop.f32.mrf.mxu0
        %v2124 = vpop.f32.mrf.mxu0
        %2125 = vdwg.mxu0
        %2126 = vmatpush.bf16.msra.mxu0 %v1657
        %2127 = vmatpush.bf16.msra.mxu0 %v1653
        %2128 = vmatpush.bf16.msra.mxu0 %v1649
        %2129 = vmatpush.bf16.msra.mxu0 %v1645
        %2130 = vmatpush.bf16.msra.mxu0 %v1641
        %2131 = vmatpush.bf16.msra.mxu0 %v1637
        %2132 = vmatpush.bf16.msra.mxu0 %v1633
        %2133 = vmatpush.bf16.msra.mxu0 %v1629
        %2134 = vmatmul.bf16.gmra.mxu0 %v704
        %v2135 = vpop.f32.mrf.mxu0
        %v2136 = vadd.f32 %v2109, %v2135
        %v2137 = vpop.f32.mrf.mxu0
        %v2138 = vadd.f32 %v2111, %v2137
        %2139 = vmatmul.bf16.gmra.mxu0 %v712
        %v2140 = vpop.f32.mrf.mxu0
        %v2141 = vadd.f32 %v2114, %v2140
        %v2142 = vpop.f32.mrf.mxu0
        %v2143 = vadd.f32 %v2116, %v2142
        %2144 = vmatmul.bf16.gmra.mxu0 %v720
        %v2145 = vpop.f32.mrf.mxu0
        %v2146 = vadd.f32 %v2119, %v2145
        %v2147 = vpop.f32.mrf.mxu0
        %v2148 = vadd.f32 %v2121, %v2147
        %2149 = vmatmul.bf16.gmra.mxu0 %v728
        %v2150 = vpop.f32.mrf.mxu0
        %v2151 = vpop.f32.mrf.mxu0
        %2152 = vdwg.mxu0
        %2153 = vmatpush.bf16.msra.mxu0 %v1689
        %2154 = vmatpush.bf16.msra.mxu0 %v1685
        %2155 = vmatpush.bf16.msra.mxu0 %v1681
        %2156 = vmatpush.bf16.msra.mxu0 %v1677
        %2157 = vmatpush.bf16.msra.mxu0 %v1673
        %2158 = vmatpush.bf16.msra.mxu0 %v1669
        %2159 = vmatpush.bf16.msra.mxu0 %v1665
        %2160 = vmatpush.bf16.msra.mxu0 %v1661
        %2161 = vmatmul.bf16.gmra.mxu0 %v705
        %v2162 = vpop.f32.mrf.mxu0
        %v2163 = vadd.f32 %v2136, %v2162
        %v2164 = vpop.f32.mrf.mxu0
        %v2165 = vadd.f32 %v2138, %v2164
        %2166 = vmatmul.bf16.gmra.mxu0 %v713
        %v2167 = vpop.f32.mrf.mxu0
        %v2168 = vadd.f32 %v2141, %v2167
        %v2169 = vpop.f32.mrf.mxu0
        %v2170 = vadd.f32 %v2143, %v2169
        %2171 = vmatmul.bf16.gmra.mxu0 %v721
        %v2172 = vpop.f32.mrf.mxu0
        %v2173 = vadd.f32 %v2146, %v2172
        %v2174 = vpop.f32.mrf.mxu0
        %v2175 = vadd.f32 %v2148, %v2174
        %2176 = vmatmul.bf16.gmra.mxu0 %v729
        %v2177 = vpop.f32.mrf.mxu0
        %v2178 = vpop.f32.mrf.mxu0
        %2179 = vdwg.mxu0
        %2180 = vmatpush.bf16.msra.mxu0 %v1721
        %2181 = vmatpush.bf16.msra.mxu0 %v1717
        %2182 = vmatpush.bf16.msra.mxu0 %v1713
        %2183 = vmatpush.bf16.msra.mxu0 %v1709
        %2184 = vmatpush.bf16.msra.mxu0 %v1705
        %2185 = vmatpush.bf16.msra.mxu0 %v1701
        %2186 = vmatpush.bf16.msra.mxu0 %v1697
        %2187 = vmatpush.bf16.msra.mxu0 %v1693
        %2188 = vmatmul.bf16.gmra.mxu0 %v706
        %v2189 = vpop.f32.mrf.mxu0
        %v2190 = vadd.f32 %v2163, %v2189
        %v2191 = vpop.f32.mrf.mxu0
        %v2192 = vadd.f32 %v2165, %v2191
        %2193 = vmatmul.bf16.gmra.mxu0 %v714
        %v2194 = vpop.f32.mrf.mxu0
        %v2195 = vadd.f32 %v2168, %v2194
        %v2196 = vpop.f32.mrf.mxu0
        %v2197 = vadd.f32 %v2170, %v2196
        %2198 = vmatmul.bf16.gmra.mxu0 %v722
        %v2199 = vpop.f32.mrf.mxu0
        %v2200 = vadd.f32 %v2173, %v2199
        %v2201 = vpop.f32.mrf.mxu0
        %v2202 = vadd.f32 %v2175, %v2201
        %2203 = vmatmul.bf16.gmra.mxu0 %v730
        %v2204 = vpop.f32.mrf.mxu0
        %v2205 = vpop.f32.mrf.mxu0
        %2206 = vdwg.mxu0
        %2207 = vmatpush.bf16.msra.mxu0 %v1753
        %2208 = vmatpush.bf16.msra.mxu0 %v1749
        %2209 = vmatpush.bf16.msra.mxu0 %v1745
        %2210 = vmatpush.bf16.msra.mxu0 %v1741
        %2211 = vmatpush.bf16.msra.mxu0 %v1737
        %2212 = vmatpush.bf16.msra.mxu0 %v1733
        %2213 = vmatpush.bf16.msra.mxu0 %v1729
        %2214 = vmatpush.bf16.msra.mxu0 %v1725
        %2215 = vmatmul.bf16.gmra.mxu0 %v707
        %v2216 = vpop.f32.mrf.mxu0
        %v2217 = vadd.f32 %v2190, %v2216
        %v2218 = vpop.f32.mrf.mxu0
        %v2219 = vadd.f32 %v2192, %v2218
        %2220 = vmatmul.bf16.gmra.mxu0 %v715
        %v2221 = vpop.f32.mrf.mxu0
        %v2222 = vadd.f32 %v2195, %v2221
        %v2223 = vpop.f32.mrf.mxu0
        %v2224 = vadd.f32 %v2197, %v2223
        %2225 = vmatmul.bf16.gmra.mxu0 %v723
        %v2226 = vpop.f32.mrf.mxu0
        %v2227 = vadd.f32 %v2200, %v2226
        %v2228 = vpop.f32.mrf.mxu0
        %v2229 = vadd.f32 %v2202, %v2228
        %2230 = vmatmul.bf16.gmra.mxu0 %v731
        %v2231 = vpop.f32.mrf.mxu0
        %v2232 = vpop.f32.mrf.mxu0
        %2233 = vdwg.mxu0
        %2234 = vmatpush.bf16.msra.mxu0 %v1785
        %2235 = vmatpush.bf16.msra.mxu0 %v1781
        %2236 = vmatpush.bf16.msra.mxu0 %v1777
        %2237 = vmatpush.bf16.msra.mxu0 %v1773
        %2238 = vmatpush.bf16.msra.mxu0 %v1769
        %2239 = vmatpush.bf16.msra.mxu0 %v1765
        %2240 = vmatpush.bf16.msra.mxu0 %v1761
        %2241 = vmatpush.bf16.msra.mxu0 %v1757
        %2242 = vmatmul.bf16.gmra.mxu0 %v708
        %v2243 = vpop.f32.mrf.mxu0
        %v2244 = vadd.f32 %v2217, %v2243
        %v2245 = vpop.f32.mrf.mxu0
        %v2246 = vadd.f32 %v2219, %v2245
        %2247 = vmatmul.bf16.gmra.mxu0 %v716
        %v2248 = vpop.f32.mrf.mxu0
        %v2249 = vadd.f32 %v2222, %v2248
        %v2250 = vpop.f32.mrf.mxu0
        %v2251 = vadd.f32 %v2224, %v2250
        %2252 = vmatmul.bf16.gmra.mxu0 %v724
        %v2253 = vpop.f32.mrf.mxu0
        %v2254 = vadd.f32 %v2227, %v2253
        %v2255 = vpop.f32.mrf.mxu0
        %v2256 = vadd.f32 %v2229, %v2255
        %2257 = vmatmul.bf16.gmra.mxu0 %v732
        %v2258 = vpop.f32.mrf.mxu0
        %v2259 = vpop.f32.mrf.mxu0
        %2260 = vdwg.mxu0
        %2261 = vmatpush.bf16.msra.mxu0 %v1562
        %2262 = vmatpush.bf16.msra.mxu0 %v1558
        %2263 = vmatpush.bf16.msra.mxu0 %v1554
        %2264 = vmatpush.bf16.msra.mxu0 %v1550
        %2265 = vmatpush.bf16.msra.mxu0 %v1546
        %2266 = vmatpush.bf16.msra.mxu0 %v1542
        %2267 = vmatpush.bf16.msra.mxu0 %v1538
        %2268 = vmatpush.bf16.msra.mxu0 %v1534
        %2269 = vmatmul.bf16.gmra.mxu0 %v701
        %v2270 = vpop.f32.mrf.mxu0
        %v2271 = vadd.f32 0.0, %v2270
        %v2272 = vpop.f32.mrf.mxu0
        %v2273 = vadd.f32 0.0, %v2272
        %2274 = vmatmul.bf16.gmra.mxu0 %v709
        %v2275 = vpop.f32.mrf.mxu0
        %v2276 = vadd.f32 0.0, %v2275
        %v2277 = vpop.f32.mrf.mxu0
        %v2278 = vadd.f32 0.0, %v2277
        %2279 = vmatmul.bf16.gmra.mxu0 %v717
        %v2280 = vpop.f32.mrf.mxu0
        %v2281 = vadd.f32 0.0, %v2280
        %v2282 = vpop.f32.mrf.mxu0
        %v2283 = vadd.f32 0.0, %v2282
        %2284 = vmatmul.bf16.gmra.mxu0 %v725
        %v2285 = vpop.f32.mrf.mxu0
        %v2286 = vpop.f32.mrf.mxu0
        %2287 = vdwg.mxu0
        %2288 = vmatpush.bf16.msra.mxu0 %v1594
        %2289 = vmatpush.bf16.msra.mxu0 %v1590
        %2290 = vmatpush.bf16.msra.mxu0 %v1586
        %2291 = vmatpush.bf16.msra.mxu0 %v1582
        %2292 = vmatpush.bf16.msra.mxu0 %v1578
        %2293 = vmatpush.bf16.msra.mxu0 %v1574
        %2294 = vmatpush.bf16.msra.mxu0 %v1570
        %2295 = vmatpush.bf16.msra.mxu0 %v1566
        %2296 = vmatmul.bf16.gmra.mxu0 %v702
        %v2297 = vpop.f32.mrf.mxu0
        %v2298 = vadd.f32 %v2271, %v2297
        %v2299 = vpop.f32.mrf.mxu0
        %v2300 = vadd.f32 %v2273, %v2299
        %2301 = vmatmul.bf16.gmra.mxu0 %v710
        %v2302 = vpop.f32.mrf.mxu0
        %v2303 = vadd.f32 %v2276, %v2302
        %v2304 = vpop.f32.mrf.mxu0
        %v2305 = vadd.f32 %v2278, %v2304
        %2306 = vmatmul.bf16.gmra.mxu0 %v718
        %v2307 = vpop.f32.mrf.mxu0
        %v2308 = vadd.f32 %v2281, %v2307
        %v2309 = vpop.f32.mrf.mxu0
        %v2310 = vadd.f32 %v2283, %v2309
        %2311 = vmatmul.bf16.gmra.mxu0 %v726
        %v2312 = vpop.f32.mrf.mxu0
        %v2313 = vpop.f32.mrf.mxu0
        %2314 = vdwg.mxu0
        %2315 = vmatpush.bf16.msra.mxu0 %v1626
        %2316 = vmatpush.bf16.msra.mxu0 %v1622
        %2317 = vmatpush.bf16.msra.mxu0 %v1618
        %2318 = vmatpush.bf16.msra.mxu0 %v1614
        %2319 = vmatpush.bf16.msra.mxu0 %v1610
        %2320 = vmatpush.bf16.msra.mxu0 %v1606
        %2321 = vmatpush.bf16.msra.mxu0 %v1602
        %2322 = vmatpush.bf16.msra.mxu0 %v1598
        %2323 = vmatmul.bf16.gmra.mxu0 %v703
        %v2324 = vpop.f32.mrf.mxu0
        %v2325 = vadd.f32 %v2298, %v2324
        %v2326 = vpop.f32.mrf.mxu0
        %v2327 = vadd.f32 %v2300, %v2326
        %2328 = vmatmul.bf16.gmra.mxu0 %v711
        %v2329 = vpop.f32.mrf.mxu0
        %v2330 = vadd.f32 %v2303, %v2329
        %v2331 = vpop.f32.mrf.mxu0
        %v2332 = vadd.f32 %v2305, %v2331
        %2333 = vmatmul.bf16.gmra.mxu0 %v719
        %v2334 = vpop.f32.mrf.mxu0
        %v2335 = vadd.f32 %v2308, %v2334
        %v2336 = vpop.f32.mrf.mxu0
        %v2337 = vadd.f32 %v2310, %v2336
        %2338 = vmatmul.bf16.gmra.mxu0 %v727
        %v2339 = vpop.f32.mrf.mxu0
        %v2340 = vpop.f32.mrf.mxu0
        %2341 = vdwg.mxu0
        %2342 = vmatpush.bf16.msra.mxu0 %v1658
        %2343 = vmatpush.bf16.msra.mxu0 %v1654
        %2344 = vmatpush.bf16.msra.mxu0 %v1650
        %2345 = vmatpush.bf16.msra.mxu0 %v1646
        %2346 = vmatpush.bf16.msra.mxu0 %v1642
        %2347 = vmatpush.bf16.msra.mxu0 %v1638
        %2348 = vmatpush.bf16.msra.mxu0 %v1634
        %2349 = vmatpush.bf16.msra.mxu0 %v1630
        %2350 = vmatmul.bf16.gmra.mxu0 %v704
        %v2351 = vpop.f32.mrf.mxu0
        %v2352 = vadd.f32 %v2325, %v2351
        %v2353 = vpop.f32.mrf.mxu0
        %v2354 = vadd.f32 %v2327, %v2353
        %2355 = vmatmul.bf16.gmra.mxu0 %v712
        %v2356 = vpop.f32.mrf.mxu0
        %v2357 = vadd.f32 %v2330, %v2356
        %v2358 = vpop.f32.mrf.mxu0
        %v2359 = vadd.f32 %v2332, %v2358
        %2360 = vmatmul.bf16.gmra.mxu0 %v720
        %v2361 = vpop.f32.mrf.mxu0
        %v2362 = vadd.f32 %v2335, %v2361
        %v2363 = vpop.f32.mrf.mxu0
        %v2364 = vadd.f32 %v2337, %v2363
        %2365 = vmatmul.bf16.gmra.mxu0 %v728
        %v2366 = vpop.f32.mrf.mxu0
        %v2367 = vpop.f32.mrf.mxu0
        %2368 = vdwg.mxu0
        %2369 = vmatpush.bf16.msra.mxu0 %v1690
        %2370 = vmatpush.bf16.msra.mxu0 %v1686
        %2371 = vmatpush.bf16.msra.mxu0 %v1682
        %2372 = vmatpush.bf16.msra.mxu0 %v1678
        %2373 = vmatpush.bf16.msra.mxu0 %v1674
        %2374 = vmatpush.bf16.msra.mxu0 %v1670
        %2375 = vmatpush.bf16.msra.mxu0 %v1666
        %2376 = vmatpush.bf16.msra.mxu0 %v1662
        %2377 = vmatmul.bf16.gmra.mxu0 %v705
        %v2378 = vpop.f32.mrf.mxu0
        %v2379 = vadd.f32 %v2352, %v2378
        %v2380 = vpop.f32.mrf.mxu0
        %v2381 = vadd.f32 %v2354, %v2380
        %2382 = vmatmul.bf16.gmra.mxu0 %v713
        %v2383 = vpop.f32.mrf.mxu0
        %v2384 = vadd.f32 %v2357, %v2383
        %v2385 = vpop.f32.mrf.mxu0
        %v2386 = vadd.f32 %v2359, %v2385
        %2387 = vmatmul.bf16.gmra.mxu0 %v721
        %v2388 = vpop.f32.mrf.mxu0
        %v2389 = vadd.f32 %v2362, %v2388
        %v2390 = vpop.f32.mrf.mxu0
        %v2391 = vadd.f32 %v2364, %v2390
        %2392 = vmatmul.bf16.gmra.mxu0 %v729
        %v2393 = vpop.f32.mrf.mxu0
        %v2394 = vpop.f32.mrf.mxu0
        %2395 = vdwg.mxu0
        %2396 = vmatpush.bf16.msra.mxu0 %v1722
        %2397 = vmatpush.bf16.msra.mxu0 %v1718
        %2398 = vmatpush.bf16.msra.mxu0 %v1714
        %2399 = vmatpush.bf16.msra.mxu0 %v1710
        %2400 = vmatpush.bf16.msra.mxu0 %v1706
        %2401 = vmatpush.bf16.msra.mxu0 %v1702
        %2402 = vmatpush.bf16.msra.mxu0 %v1698
        %2403 = vmatpush.bf16.msra.mxu0 %v1694
        %2404 = vmatmul.bf16.gmra.mxu0 %v706
        %v2405 = vpop.f32.mrf.mxu0
        %v2406 = vadd.f32 %v2379, %v2405
        %v2407 = vpop.f32.mrf.mxu0
        %v2408 = vadd.f32 %v2381, %v2407
        %2409 = vmatmul.bf16.gmra.mxu0 %v714
        %v2410 = vpop.f32.mrf.mxu0
        %v2411 = vadd.f32 %v2384, %v2410
        %v2412 = vpop.f32.mrf.mxu0
        %v2413 = vadd.f32 %v2386, %v2412
        %2414 = vmatmul.bf16.gmra.mxu0 %v722
        %v2415 = vpop.f32.mrf.mxu0
        %v2416 = vadd.f32 %v2389, %v2415
        %v2417 = vpop.f32.mrf.mxu0
        %v2418 = vadd.f32 %v2391, %v2417
        %2419 = vmatmul.bf16.gmra.mxu0 %v730
        %v2420 = vpop.f32.mrf.mxu0
        %v2421 = vpop.f32.mrf.mxu0
        %2422 = vdwg.mxu0
        %2423 = vmatpush.bf16.msra.mxu0 %v1754
        %2424 = vmatpush.bf16.msra.mxu0 %v1750
        %2425 = vmatpush.bf16.msra.mxu0 %v1746
        %2426 = vmatpush.bf16.msra.mxu0 %v1742
        %2427 = vmatpush.bf16.msra.mxu0 %v1738
        %2428 = vmatpush.bf16.msra.mxu0 %v1734
        %2429 = vmatpush.bf16.msra.mxu0 %v1730
        %2430 = vmatpush.bf16.msra.mxu0 %v1726
        %2431 = vmatmul.bf16.gmra.mxu0 %v707
        %v2432 = vpop.f32.mrf.mxu0
        %v2433 = vadd.f32 %v2406, %v2432
        %v2434 = vpop.f32.mrf.mxu0
        %v2435 = vadd.f32 %v2408, %v2434
        %2436 = vmatmul.bf16.gmra.mxu0 %v715
        %v2437 = vpop.f32.mrf.mxu0
        %v2438 = vadd.f32 %v2411, %v2437
        %v2439 = vpop.f32.mrf.mxu0
        %v2440 = vadd.f32 %v2413, %v2439
        %2441 = vmatmul.bf16.gmra.mxu0 %v723
        %v2442 = vpop.f32.mrf.mxu0
        %v2443 = vadd.f32 %v2416, %v2442
        %v2444 = vpop.f32.mrf.mxu0
        %v2445 = vadd.f32 %v2418, %v2444
        %2446 = vmatmul.bf16.gmra.mxu0 %v731
        %v2447 = vpop.f32.mrf.mxu0
        %v2448 = vpop.f32.mrf.mxu0
        %2449 = vdwg.mxu0
        %2450 = vmatpush.bf16.msra.mxu0 %v1786
        %2451 = vmatpush.bf16.msra.mxu0 %v1782
        %2452 = vmatpush.bf16.msra.mxu0 %v1778
        %2453 = vmatpush.bf16.msra.mxu0 %v1774
        %2454 = vmatpush.bf16.msra.mxu0 %v1770
        %2455 = vmatpush.bf16.msra.mxu0 %v1766
        %2456 = vmatpush.bf16.msra.mxu0 %v1762
        %2457 = vmatpush.bf16.msra.mxu0 %v1758
        %2458 = vmatmul.bf16.gmra.mxu0 %v708
        %v2459 = vpop.f32.mrf.mxu0
        %v2460 = vadd.f32 %v2433, %v2459
        %v2461 = vpop.f32.mrf.mxu0
        %v2462 = vadd.f32 %v2435, %v2461
        %2463 = vmatmul.bf16.gmra.mxu0 %v716
        %v2464 = vpop.f32.mrf.mxu0
        %v2465 = vadd.f32 %v2438, %v2464
        %v2466 = vpop.f32.mrf.mxu0
        %v2467 = vadd.f32 %v2440, %v2466
        %2468 = vmatmul.bf16.gmra.mxu0 %v724
        %v2469 = vpop.f32.mrf.mxu0
        %v2470 = vadd.f32 %v2443, %v2469
        %v2471 = vpop.f32.mrf.mxu0
        %v2472 = vadd.f32 %v2445, %v2471
        %2473 = vmatmul.bf16.gmra.mxu0 %v732
        %v2474 = vpop.f32.mrf.mxu0
        %v2475 = vpop.f32.mrf.mxu0
        %2476 = vdwg.mxu0
        %2477 = vmatpush.bf16.msra.mxu0 %v1563
        %2478 = vmatpush.bf16.msra.mxu0 %v1559
        %2479 = vmatpush.bf16.msra.mxu0 %v1555
        %2480 = vmatpush.bf16.msra.mxu0 %v1551
        %2481 = vmatpush.bf16.msra.mxu0 %v1547
        %2482 = vmatpush.bf16.msra.mxu0 %v1543
        %2483 = vmatpush.bf16.msra.mxu0 %v1539
        %2484 = vmatpush.bf16.msra.mxu0 %v1535
        %2485 = vmatmul.bf16.gmra.mxu0 %v701
        %v2486 = vpop.f32.mrf.mxu0
        %v2487 = vadd.f32 0.0, %v2486
        %v2488 = vpop.f32.mrf.mxu0
        %v2489 = vadd.f32 0.0, %v2488
        %2490 = vmatmul.bf16.gmra.mxu0 %v709
        %v2491 = vpop.f32.mrf.mxu0
        %v2492 = vadd.f32 0.0, %v2491
        %v2493 = vpop.f32.mrf.mxu0
        %v2494 = vadd.f32 0.0, %v2493
        %2495 = vmatmul.bf16.gmra.mxu0 %v717
        %v2496 = vpop.f32.mrf.mxu0
        %v2497 = vadd.f32 0.0, %v2496
        %v2498 = vpop.f32.mrf.mxu0
        %v2499 = vadd.f32 0.0, %v2498
        %2500 = vmatmul.bf16.gmra.mxu0 %v725
        %v2501 = vpop.f32.mrf.mxu0
        %v2502 = vpop.f32.mrf.mxu0
        %2503 = vdwg.mxu0
        %2504 = vmatpush.bf16.msra.mxu0 %v1595
        %2505 = vmatpush.bf16.msra.mxu0 %v1591
        %2506 = vmatpush.bf16.msra.mxu0 %v1587
        %2507 = vmatpush.bf16.msra.mxu0 %v1583
        %2508 = vmatpush.bf16.msra.mxu0 %v1579
        %2509 = vmatpush.bf16.msra.mxu0 %v1575
        %2510 = vmatpush.bf16.msra.mxu0 %v1571
        %2511 = vmatpush.bf16.msra.mxu0 %v1567
        %2512 = vmatmul.bf16.gmra.mxu0 %v702
        %v2513 = vpop.f32.mrf.mxu0
        %v2514 = vadd.f32 %v2487, %v2513
        %v2515 = vpop.f32.mrf.mxu0
        %v2516 = vadd.f32 %v2489, %v2515
        %2517 = vmatmul.bf16.gmra.mxu0 %v710
        %v2518 = vpop.f32.mrf.mxu0
        %v2519 = vadd.f32 %v2492, %v2518
        %v2520 = vpop.f32.mrf.mxu0
        %v2521 = vadd.f32 %v2494, %v2520
        %2522 = vmatmul.bf16.gmra.mxu0 %v718
        %v2523 = vpop.f32.mrf.mxu0
        %v2524 = vadd.f32 %v2497, %v2523
        %v2525 = vpop.f32.mrf.mxu0
        %v2526 = vadd.f32 %v2499, %v2525
        %2527 = vmatmul.bf16.gmra.mxu0 %v726
        %v2528 = vpop.f32.mrf.mxu0
        %v2529 = vpop.f32.mrf.mxu0
        %2530 = vdwg.mxu0
        %2531 = vmatpush.bf16.msra.mxu0 %v1627
        %2532 = vmatpush.bf16.msra.mxu0 %v1623
        %2533 = vmatpush.bf16.msra.mxu0 %v1619
        %2534 = vmatpush.bf16.msra.mxu0 %v1615
        %2535 = vmatpush.bf16.msra.mxu0 %v1611
        %2536 = vmatpush.bf16.msra.mxu0 %v1607
        %2537 = vmatpush.bf16.msra.mxu0 %v1603
        %2538 = vmatpush.bf16.msra.mxu0 %v1599
        %2539 = vmatmul.bf16.gmra.mxu0 %v703
        %v2540 = vpop.f32.mrf.mxu0
        %v2541 = vadd.f32 %v2514, %v2540
        %v2542 = vpop.f32.mrf.mxu0
        %v2543 = vadd.f32 %v2516, %v2542
        %2544 = vmatmul.bf16.gmra.mxu0 %v711
        %v2545 = vpop.f32.mrf.mxu0
        %v2546 = vadd.f32 %v2519, %v2545
        %v2547 = vpop.f32.mrf.mxu0
        %v2548 = vadd.f32 %v2521, %v2547
        %2549 = vmatmul.bf16.gmra.mxu0 %v719
        %v2550 = vpop.f32.mrf.mxu0
        %v2551 = vadd.f32 %v2524, %v2550
        %v2552 = vpop.f32.mrf.mxu0
        %v2553 = vadd.f32 %v2526, %v2552
        %2554 = vmatmul.bf16.gmra.mxu0 %v727
        %v2555 = vpop.f32.mrf.mxu0
        %v2556 = vpop.f32.mrf.mxu0
        %2557 = vdwg.mxu0
        %2558 = vmatpush.bf16.msra.mxu0 %v1659
        %2559 = vmatpush.bf16.msra.mxu0 %v1655
        %2560 = vmatpush.bf16.msra.mxu0 %v1651
        %2561 = vmatpush.bf16.msra.mxu0 %v1647
        %2562 = vmatpush.bf16.msra.mxu0 %v1643
        %2563 = vmatpush.bf16.msra.mxu0 %v1639
        %2564 = vmatpush.bf16.msra.mxu0 %v1635
        %2565 = vmatpush.bf16.msra.mxu0 %v1631
        %2566 = vmatmul.bf16.gmra.mxu0 %v704
        %v2567 = vpop.f32.mrf.mxu0
        %v2568 = vadd.f32 %v2541, %v2567
        %v2569 = vpop.f32.mrf.mxu0
        %v2570 = vadd.f32 %v2543, %v2569
        %2571 = vmatmul.bf16.gmra.mxu0 %v712
        %v2572 = vpop.f32.mrf.mxu0
        %v2573 = vadd.f32 %v2546, %v2572
        %v2574 = vpop.f32.mrf.mxu0
        %v2575 = vadd.f32 %v2548, %v2574
        %2576 = vmatmul.bf16.gmra.mxu0 %v720
        %v2577 = vpop.f32.mrf.mxu0
        %v2578 = vadd.f32 %v2551, %v2577
        %v2579 = vpop.f32.mrf.mxu0
        %v2580 = vadd.f32 %v2553, %v2579
        %2581 = vmatmul.bf16.gmra.mxu0 %v728
        %v2582 = vpop.f32.mrf.mxu0
        %v2583 = vpop.f32.mrf.mxu0
        %2584 = vdwg.mxu0
        %2585 = vmatpush.bf16.msra.mxu0 %v1691
        %2586 = vmatpush.bf16.msra.mxu0 %v1687
        %2587 = vmatpush.bf16.msra.mxu0 %v1683
        %2588 = vmatpush.bf16.msra.mxu0 %v1679
        %2589 = vmatpush.bf16.msra.mxu0 %v1675
        %2590 = vmatpush.bf16.msra.mxu0 %v1671
        %2591 = vmatpush.bf16.msra.mxu0 %v1667
        %2592 = vmatpush.bf16.msra.mxu0 %v1663
        %2593 = vmatmul.bf16.gmra.mxu0 %v705
        %v2594 = vpop.f32.mrf.mxu0
        %v2595 = vadd.f32 %v2568, %v2594
        %v2596 = vpop.f32.mrf.mxu0
        %v2597 = vadd.f32 %v2570, %v2596
        %2598 = vmatmul.bf16.gmra.mxu0 %v713
        %v2599 = vpop.f32.mrf.mxu0
        %v2600 = vadd.f32 %v2573, %v2599
        %v2601 = vpop.f32.mrf.mxu0
        %v2602 = vadd.f32 %v2575, %v2601
        %2603 = vmatmul.bf16.gmra.mxu0 %v721
        %v2604 = vpop.f32.mrf.mxu0
        %v2605 = vadd.f32 %v2578, %v2604
        %v2606 = vpop.f32.mrf.mxu0
        %v2607 = vadd.f32 %v2580, %v2606
        %2608 = vmatmul.bf16.gmra.mxu0 %v729
        %v2609 = vpop.f32.mrf.mxu0
        %v2610 = vpop.f32.mrf.mxu0
        %2611 = vdwg.mxu0
        %2612 = vmatpush.bf16.msra.mxu0 %v1723
        %2613 = vmatpush.bf16.msra.mxu0 %v1719
        %2614 = vmatpush.bf16.msra.mxu0 %v1715
        %2615 = vmatpush.bf16.msra.mxu0 %v1711
        %2616 = vmatpush.bf16.msra.mxu0 %v1707
        %2617 = vmatpush.bf16.msra.mxu0 %v1703
        %2618 = vmatpush.bf16.msra.mxu0 %v1699
        %2619 = vmatpush.bf16.msra.mxu0 %v1695
        %2620 = vmatmul.bf16.gmra.mxu0 %v706
        %v2621 = vpop.f32.mrf.mxu0
        %v2622 = vadd.f32 %v2595, %v2621
        %v2623 = vpop.f32.mrf.mxu0
        %v2624 = vadd.f32 %v2597, %v2623
        %2625 = vmatmul.bf16.gmra.mxu0 %v714
        %v2626 = vpop.f32.mrf.mxu0
        %v2627 = vadd.f32 %v2600, %v2626
        %v2628 = vpop.f32.mrf.mxu0
        %v2629 = vadd.f32 %v2602, %v2628
        %2630 = vmatmul.bf16.gmra.mxu0 %v722
        %v2631 = vpop.f32.mrf.mxu0
        %v2632 = vadd.f32 %v2605, %v2631
        %v2633 = vpop.f32.mrf.mxu0
        %v2634 = vadd.f32 %v2607, %v2633
        %2635 = vmatmul.bf16.gmra.mxu0 %v730
        %v2636 = vpop.f32.mrf.mxu0
        %v2637 = vpop.f32.mrf.mxu0
        %2638 = vdwg.mxu0
        %2639 = vmatpush.bf16.msra.mxu0 %v1755
        %2640 = vmatpush.bf16.msra.mxu0 %v1751
        %2641 = vmatpush.bf16.msra.mxu0 %v1747
        %2642 = vmatpush.bf16.msra.mxu0 %v1743
        %2643 = vmatpush.bf16.msra.mxu0 %v1739
        %2644 = vmatpush.bf16.msra.mxu0 %v1735
        %2645 = vmatpush.bf16.msra.mxu0 %v1731
        %2646 = vmatpush.bf16.msra.mxu0 %v1727
        %2647 = vmatmul.bf16.gmra.mxu0 %v707
        %v2648 = vpop.f32.mrf.mxu0
        %v2649 = vadd.f32 %v2622, %v2648
        %v2650 = vpop.f32.mrf.mxu0
        %v2651 = vadd.f32 %v2624, %v2650
        %2652 = vmatmul.bf16.gmra.mxu0 %v715
        %v2653 = vpop.f32.mrf.mxu0
        %v2654 = vadd.f32 %v2627, %v2653
        %v2655 = vpop.f32.mrf.mxu0
        %v2656 = vadd.f32 %v2629, %v2655
        %2657 = vmatmul.bf16.gmra.mxu0 %v723
        %v2658 = vpop.f32.mrf.mxu0
        %v2659 = vadd.f32 %v2632, %v2658
        %v2660 = vpop.f32.mrf.mxu0
        %v2661 = vadd.f32 %v2634, %v2660
        %2662 = vmatmul.bf16.gmra.mxu0 %v731
        %v2663 = vpop.f32.mrf.mxu0
        %v2664 = vpop.f32.mrf.mxu0
        %2665 = vdwg.mxu0
        %2666 = vmatpush.bf16.msra.mxu0 %v1787
        %2667 = vmatpush.bf16.msra.mxu0 %v1783
        %2668 = vmatpush.bf16.msra.mxu0 %v1779
        %2669 = vmatpush.bf16.msra.mxu0 %v1775
        %2670 = vmatpush.bf16.msra.mxu0 %v1771
        %2671 = vmatpush.bf16.msra.mxu0 %v1767
        %2672 = vmatpush.bf16.msra.mxu0 %v1763
        %2673 = vmatpush.bf16.msra.mxu0 %v1759
        %2674 = vmatmul.bf16.gmra.mxu0 %v708
        %v2675 = vpop.f32.mrf.mxu0
        %v2676 = vadd.f32 %v2649, %v2675
        %v2677 = vpop.f32.mrf.mxu0
        %v2678 = vadd.f32 %v2651, %v2677
        %2679 = vmatmul.bf16.gmra.mxu0 %v716
        %v2680 = vpop.f32.mrf.mxu0
        %v2681 = vadd.f32 %v2654, %v2680
        %v2682 = vpop.f32.mrf.mxu0
        %v2683 = vadd.f32 %v2656, %v2682
        %2684 = vmatmul.bf16.gmra.mxu0 %v724
        %v2685 = vpop.f32.mrf.mxu0
        %v2686 = vadd.f32 %v2659, %v2685
        %v2687 = vpop.f32.mrf.mxu0
        %v2688 = vadd.f32 %v2661, %v2687
        %2689 = vmatmul.bf16.gmra.mxu0 %v732
        %v2690 = vpop.f32.mrf.mxu0
        %v2691 = vpop.f32.mrf.mxu0
        %2692 = vdwg.mxu0
        %2693 = vmatpush.bf16.msra.mxu0 %v1564
        %2694 = vmatpush.bf16.msra.mxu0 %v1560
        %2695 = vmatpush.bf16.msra.mxu0 %v1556
        %2696 = vmatpush.bf16.msra.mxu0 %v1552
        %2697 = vmatpush.bf16.msra.mxu0 %v1548
        %2698 = vmatpush.bf16.msra.mxu0 %v1544
        %2699 = vmatpush.bf16.msra.mxu0 %v1540
        %2700 = vmatpush.bf16.msra.mxu0 %v1536
        %2701 = vmatmul.bf16.gmra.mxu0 %v701
        %v2702 = vpop.f32.mrf.mxu0
        %v2703 = vadd.f32 0.0, %v2702
        %v2704 = vpop.f32.mrf.mxu0
        %v2705 = vadd.f32 0.0, %v2704
        %2706 = vmatmul.bf16.gmra.mxu0 %v709
        %v2707 = vpop.f32.mrf.mxu0
        %v2708 = vadd.f32 0.0, %v2707
        %v2709 = vpop.f32.mrf.mxu0
        %v2710 = vadd.f32 0.0, %v2709
        %2711 = vmatmul.bf16.gmra.mxu0 %v717
        %v2712 = vpop.f32.mrf.mxu0
        %v2713 = vadd.f32 0.0, %v2712
        %v2714 = vpop.f32.mrf.mxu0
        %v2715 = vadd.f32 0.0, %v2714
        %2716 = vmatmul.bf16.gmra.mxu0 %v725
        %v2717 = vpop.f32.mrf.mxu0
        %v2718 = vpop.f32.mrf.mxu0
        %2719 = vdwg.mxu0
        %2720 = vmatpush.bf16.msra.mxu0 %v1596
        %2721 = vmatpush.bf16.msra.mxu0 %v1592
        %2722 = vmatpush.bf16.msra.mxu0 %v1588
        %2723 = vmatpush.bf16.msra.mxu0 %v1584
        %2724 = vmatpush.bf16.msra.mxu0 %v1580
        %2725 = vmatpush.bf16.msra.mxu0 %v1576
        %2726 = vmatpush.bf16.msra.mxu0 %v1572
        %2727 = vmatpush.bf16.msra.mxu0 %v1568
        %2728 = vmatmul.bf16.gmra.mxu0 %v702
        %v2729 = vpop.f32.mrf.mxu0
        %v2730 = vadd.f32 %v2703, %v2729
        %v2731 = vpop.f32.mrf.mxu0
        %v2732 = vadd.f32 %v2705, %v2731
        %2733 = vmatmul.bf16.gmra.mxu0 %v710
        %v2734 = vpop.f32.mrf.mxu0
        %v2735 = vadd.f32 %v2708, %v2734
        %v2736 = vpop.f32.mrf.mxu0
        %v2737 = vadd.f32 %v2710, %v2736
        %2738 = vmatmul.bf16.gmra.mxu0 %v718
        %v2739 = vpop.f32.mrf.mxu0
        %v2740 = vadd.f32 %v2713, %v2739
        %v2741 = vpop.f32.mrf.mxu0
        %v2742 = vadd.f32 %v2715, %v2741
        %2743 = vmatmul.bf16.gmra.mxu0 %v726
        %v2744 = vpop.f32.mrf.mxu0
        %v2745 = vpop.f32.mrf.mxu0
        %2746 = vdwg.mxu0
        %2747 = vmatpush.bf16.msra.mxu0 %v1628
        %2748 = vmatpush.bf16.msra.mxu0 %v1624
        %2749 = vmatpush.bf16.msra.mxu0 %v1620
        %2750 = vmatpush.bf16.msra.mxu0 %v1616
        %2751 = vmatpush.bf16.msra.mxu0 %v1612
        %2752 = vmatpush.bf16.msra.mxu0 %v1608
        %2753 = vmatpush.bf16.msra.mxu0 %v1604
        %2754 = vmatpush.bf16.msra.mxu0 %v1600
        %2755 = vmatmul.bf16.gmra.mxu0 %v703
        %v2756 = vpop.f32.mrf.mxu0
        %v2757 = vadd.f32 %v2730, %v2756
        %v2758 = vpop.f32.mrf.mxu0
        %v2759 = vadd.f32 %v2732, %v2758
        %2760 = vmatmul.bf16.gmra.mxu0 %v711
        %v2761 = vpop.f32.mrf.mxu0
        %v2762 = vadd.f32 %v2735, %v2761
        %v2763 = vpop.f32.mrf.mxu0
        %v2764 = vadd.f32 %v2737, %v2763
        %2765 = vmatmul.bf16.gmra.mxu0 %v719
        %v2766 = vpop.f32.mrf.mxu0
        %v2767 = vadd.f32 %v2740, %v2766
        %v2768 = vpop.f32.mrf.mxu0
        %v2769 = vadd.f32 %v2742, %v2768
        %2770 = vmatmul.bf16.gmra.mxu0 %v727
        %v2771 = vpop.f32.mrf.mxu0
        %v2772 = vpop.f32.mrf.mxu0
        %2773 = vdwg.mxu0
        %2774 = vmatpush.bf16.msra.mxu0 %v1660
        %2775 = vmatpush.bf16.msra.mxu0 %v1656
        %2776 = vmatpush.bf16.msra.mxu0 %v1652
        %2777 = vmatpush.bf16.msra.mxu0 %v1648
        %2778 = vmatpush.bf16.msra.mxu0 %v1644
        %2779 = vmatpush.bf16.msra.mxu0 %v1640
        %2780 = vmatpush.bf16.msra.mxu0 %v1636
        %2781 = vmatpush.bf16.msra.mxu0 %v1632
        %2782 = vmatmul.bf16.gmra.mxu0 %v704
        %v2783 = vpop.f32.mrf.mxu0
        %v2784 = vadd.f32 %v2757, %v2783
        %v2785 = vpop.f32.mrf.mxu0
        %v2786 = vadd.f32 %v2759, %v2785
        %2787 = vmatmul.bf16.gmra.mxu0 %v712
        %v2788 = vpop.f32.mrf.mxu0
        %v2789 = vadd.f32 %v2762, %v2788
        %v2790 = vpop.f32.mrf.mxu0
        %v2791 = vadd.f32 %v2764, %v2790
        %2792 = vmatmul.bf16.gmra.mxu0 %v720
        %v2793 = vpop.f32.mrf.mxu0
        %v2794 = vadd.f32 %v2767, %v2793
        %v2795 = vpop.f32.mrf.mxu0
        %v2796 = vadd.f32 %v2769, %v2795
        %2797 = vmatmul.bf16.gmra.mxu0 %v728
        %v2798 = vpop.f32.mrf.mxu0
        %v2799 = vpop.f32.mrf.mxu0
        %2800 = vdwg.mxu0
        %2801 = vmatpush.bf16.msra.mxu0 %v1692
        %2802 = vmatpush.bf16.msra.mxu0 %v1688
        %2803 = vmatpush.bf16.msra.mxu0 %v1684
        %2804 = vmatpush.bf16.msra.mxu0 %v1680
        %2805 = vmatpush.bf16.msra.mxu0 %v1676
        %2806 = vmatpush.bf16.msra.mxu0 %v1672
        %2807 = vmatpush.bf16.msra.mxu0 %v1668
        %2808 = vmatpush.bf16.msra.mxu0 %v1664
        %2809 = vmatmul.bf16.gmra.mxu0 %v705
        %v2810 = vpop.f32.mrf.mxu0
        %v2811 = vadd.f32 %v2784, %v2810
        %v2812 = vpop.f32.mrf.mxu0
        %v2813 = vadd.f32 %v2786, %v2812
        %2814 = vmatmul.bf16.gmra.mxu0 %v713
        %v2815 = vpop.f32.mrf.mxu0
        %v2816 = vadd.f32 %v2789, %v2815
        %v2817 = vpop.f32.mrf.mxu0
        %v2818 = vadd.f32 %v2791, %v2817
        %2819 = vmatmul.bf16.gmra.mxu0 %v721
        %v2820 = vpop.f32.mrf.mxu0
        %v2821 = vadd.f32 %v2794, %v2820
        %v2822 = vpop.f32.mrf.mxu0
        %v2823 = vadd.f32 %v2796, %v2822
        %2824 = vmatmul.bf16.gmra.mxu0 %v729
        %v2825 = vpop.f32.mrf.mxu0
        %v2826 = vpop.f32.mrf.mxu0
        %2827 = vdwg.mxu0
        %2828 = vmatpush.bf16.msra.mxu0 %v1724
        %2829 = vmatpush.bf16.msra.mxu0 %v1720
        %2830 = vmatpush.bf16.msra.mxu0 %v1716
        %2831 = vmatpush.bf16.msra.mxu0 %v1712
        %2832 = vmatpush.bf16.msra.mxu0 %v1708
        %2833 = vmatpush.bf16.msra.mxu0 %v1704
        %2834 = vmatpush.bf16.msra.mxu0 %v1700
        %2835 = vmatpush.bf16.msra.mxu0 %v1696
        %2836 = vmatmul.bf16.gmra.mxu0 %v706
        %v2837 = vpop.f32.mrf.mxu0
        %v2838 = vadd.f32 %v2811, %v2837
        %v2839 = vpop.f32.mrf.mxu0
        %v2840 = vadd.f32 %v2813, %v2839
        %2841 = vmatmul.bf16.gmra.mxu0 %v714
        %v2842 = vpop.f32.mrf.mxu0
        %v2843 = vadd.f32 %v2816, %v2842
        %v2844 = vpop.f32.mrf.mxu0
        %v2845 = vadd.f32 %v2818, %v2844
        %2846 = vmatmul.bf16.gmra.mxu0 %v722
        %v2847 = vpop.f32.mrf.mxu0
        %v2848 = vadd.f32 %v2821, %v2847
        %v2849 = vpop.f32.mrf.mxu0
        %v2850 = vadd.f32 %v2823, %v2849
        %2851 = vmatmul.bf16.gmra.mxu0 %v730
        %v2852 = vpop.f32.mrf.mxu0
        %v2853 = vpop.f32.mrf.mxu0
        %2854 = vdwg.mxu0
        %2855 = vmatpush.bf16.msra.mxu0 %v1756
        %2856 = vmatpush.bf16.msra.mxu0 %v1752
        %2857 = vmatpush.bf16.msra.mxu0 %v1748
        %2858 = vmatpush.bf16.msra.mxu0 %v1744
        %2859 = vmatpush.bf16.msra.mxu0 %v1740
        %2860 = vmatpush.bf16.msra.mxu0 %v1736
        %2861 = vmatpush.bf16.msra.mxu0 %v1732
        %2862 = vmatpush.bf16.msra.mxu0 %v1728
        %2863 = vmatmul.bf16.gmra.mxu0 %v707
        %v2864 = vpop.f32.mrf.mxu0
        %v2865 = vadd.f32 %v2838, %v2864
        %v2866 = vpop.f32.mrf.mxu0
        %v2867 = vadd.f32 %v2840, %v2866
        %2868 = vmatmul.bf16.gmra.mxu0 %v715
        %v2869 = vpop.f32.mrf.mxu0
        %v2870 = vadd.f32 %v2843, %v2869
        %v2871 = vpop.f32.mrf.mxu0
        %v2872 = vadd.f32 %v2845, %v2871
        %2873 = vmatmul.bf16.gmra.mxu0 %v723
        %v2874 = vpop.f32.mrf.mxu0
        %v2875 = vadd.f32 %v2848, %v2874
        %v2876 = vpop.f32.mrf.mxu0
        %v2877 = vadd.f32 %v2850, %v2876
        %2878 = vmatmul.bf16.gmra.mxu0 %v731
        %v2879 = vpop.f32.mrf.mxu0
        %v2880 = vpop.f32.mrf.mxu0
        %2881 = vdwg.mxu0
        %2882 = vmatpush.bf16.msra.mxu0 %v1788
        %2883 = vmatpush.bf16.msra.mxu0 %v1784
        %2884 = vmatpush.bf16.msra.mxu0 %v1780
        %2885 = vmatpush.bf16.msra.mxu0 %v1776
        %2886 = vmatpush.bf16.msra.mxu0 %v1772
        %2887 = vmatpush.bf16.msra.mxu0 %v1768
        %2888 = vmatpush.bf16.msra.mxu0 %v1764
        %2889 = vmatpush.bf16.msra.mxu0 %v1760
        %2890 = vmatmul.bf16.gmra.mxu0 %v708
        %v2891 = vpop.f32.mrf.mxu0
        %v2892 = vadd.f32 %v2865, %v2891
        %v2893 = vpop.f32.mrf.mxu0
        %v2894 = vadd.f32 %v2867, %v2893
        %2895 = vmatmul.bf16.gmra.mxu0 %v716
        %v2896 = vpop.f32.mrf.mxu0
        %v2897 = vadd.f32 %v2870, %v2896
        %v2898 = vpop.f32.mrf.mxu0
        %v2899 = vadd.f32 %v2872, %v2898
        %2900 = vmatmul.bf16.gmra.mxu0 %v724
        %v2901 = vpop.f32.mrf.mxu0
        %v2902 = vadd.f32 %v2875, %v2901
        %v2903 = vpop.f32.mrf.mxu0
        %v2904 = vadd.f32 %v2877, %v2903
        %2905 = vmatmul.bf16.gmra.mxu0 %v732
        %v2906 = vpop.f32.mrf.mxu0
        %v2907 = vpop.f32.mrf.mxu0
        %2908 = vdwg.mxu0
        %v2909 = vld [vmem:[%s267] sm:$0xff]
        %v2910 = vld [vmem:[%s267 + $0x8] sm:$0xff]
        %v2911 = vld [vmem:[%s267 + $0x10] sm:$0xff]
        %v2912 = vld [vmem:[%s267 + $0x18] sm:$0xff]
        %v2913 = vld [vmem:[%s267 + $0x20] sm:$0xff]
        %v2914 = vld [vmem:[%s267 + $0x28] sm:$0xff]
        %v2915 = vunpack.c.l.bf16 %v2909
        %v2916 = vunpack.c.h.bf16 %v2909
        %v2917 = vunpack.c.l.bf16 %v2910
        %v2918 = vunpack.c.h.bf16 %v2910
        %v2919 = vunpack.c.l.bf16 %v2911
        %v2920 = vunpack.c.h.bf16 %v2911
        %v2921 = vunpack.c.l.bf16 %v2912
        %v2922 = vunpack.c.h.bf16 %v2912
        %v2923 = vunpack.c.l.bf16 %v2913
        %v2924 = vunpack.c.h.bf16 %v2913
        %v2925 = vunpack.c.l.bf16 %v2914
        %v2926 = vunpack.c.h.bf16 %v2914
        %v2927 = vmul.f32 %v2244, %v2915
        %v2928 = vmul.f32 %v2460, %v2916
        %v2929 = vmul.f32 %v2676, %v2917
        %v2930 = vmul.f32 %v2892, %v2918
        %v2931 = vmul.f32 %v2246, %v2919
        %v2932 = vmul.f32 %v2462, %v2920
        %v2933 = vmul.f32 %v2678, %v2921
        %v2934 = vmul.f32 %v2894, %v2922
        %v2935 = vmul.f32 %v2249, %v2923
        %v2936 = vmul.f32 %v2465, %v2924
        %v2937 = vmul.f32 %v2681, %v2925
        %v2938 = vmul.f32 %v2897, %v2926
        %v2939 = vmul.f32 %v2251, %v2915
        %v2940 = vmul.f32 %v2467, %v2916
        %v2941 = vmul.f32 %v2683, %v2917
        %v2942 = vmul.f32 %v2899, %v2918
        %v2943 = vmul.f32 %v2254, %v2919
        %v2944 = vmul.f32 %v2470, %v2920
        %v2945 = vmul.f32 %v2686, %v2921
        %v2946 = vmul.f32 %v2902, %v2922
        %v2947 = vmul.f32 %v2256, %v2923
        %v2948 = vmul.f32 %v2472, %v2924
        %v2949 = vmul.f32 %v2688, %v2925
        %v2950 = vmul.f32 %v2904, %v2926
        %v2951 = vadd.f32 %v2927, %v2931
        %v2952 = vadd.f32 %v2951, %v2935
        %v2953 = vrot.slane %v2952, 4
        %v2954 = vadd.f32 %v2952, %v2953
        %v2955 = vrot.slane %v2954, 2
        %v2956 = vadd.f32 %v2954, %v2955
        %v2957 = vrot.slane %v2956, 1
        %v2958 = vadd.f32 %v2956, %v2957
        %v2959 = vadd.f32 %v2928, %v2932
        %v2960 = vadd.f32 %v2959, %v2936
        %v2961 = vrot.slane %v2960, 4
        %v2962 = vadd.f32 %v2960, %v2961
        %v2963 = vrot.slane %v2962, 2
        %v2964 = vadd.f32 %v2962, %v2963
        %v2965 = vrot.slane %v2964, 1
        %v2966 = vadd.f32 %v2964, %v2965
        %v2967 = vadd.f32 %v2929, %v2933
        %v2968 = vadd.f32 %v2967, %v2937
        %v2969 = vrot.slane %v2968, 4
        %v2970 = vadd.f32 %v2968, %v2969
        %v2971 = vrot.slane %v2970, 2
        %v2972 = vadd.f32 %v2970, %v2971
        %v2973 = vrot.slane %v2972, 1
        %v2974 = vadd.f32 %v2972, %v2973
        %v2975 = vadd.f32 %v2930, %v2934
        %v2976 = vadd.f32 %v2975, %v2938
        %v2977 = vrot.slane %v2976, 4
        %v2978 = vadd.f32 %v2976, %v2977
        %v2979 = vrot.slane %v2978, 2
        %v2980 = vadd.f32 %v2978, %v2979
        %v2981 = vrot.slane %v2980, 1
        %v2982 = vadd.f32 %v2980, %v2981
        %v2983 = vadd.f32 %v2939, %v2943
        %v2984 = vadd.f32 %v2983, %v2947
        %v2985 = vrot.slane %v2984, 4
        %v2986 = vadd.f32 %v2984, %v2985
        %v2987 = vrot.slane %v2986, 2
        %v2988 = vadd.f32 %v2986, %v2987
        %v2989 = vrot.slane %v2988, 1
        %v2990 = vadd.f32 %v2988, %v2989
        %v2991 = vadd.f32 %v2940, %v2944
        %v2992 = vadd.f32 %v2991, %v2948
        %v2993 = vrot.slane %v2992, 4
        %v2994 = vadd.f32 %v2992, %v2993
        %v2995 = vrot.slane %v2994, 2
        %v2996 = vadd.f32 %v2994, %v2995
        %v2997 = vrot.slane %v2996, 1
        %v2998 = vadd.f32 %v2996, %v2997
        %v2999 = vadd.f32 %v2941, %v2945
        %v3000 = vadd.f32 %v2999, %v2949
        %v3001 = vrot.slane %v3000, 4
        %v3002 = vadd.f32 %v3000, %v3001
        %v3003 = vrot.slane %v3002, 2
        %v3004 = vadd.f32 %v3002, %v3003
        %v3005 = vrot.slane %v3004, 1
        %v3006 = vadd.f32 %v3004, %v3005
        %v3007 = vadd.f32 %v2942, %v2946
        %v3008 = vadd.f32 %v3007, %v2950
        %v3009 = vrot.slane %v3008, 4
        %v3010 = vadd.f32 %v3008, %v3009
        %v3011 = vrot.slane %v3010, 2
        %v3012 = vadd.f32 %v3010, %v3011
        %v3013 = vrot.slane %v3012, 1
        %v3014 = vadd.f32 %v3012, %v3013
        %v3015 = vmax.f32 %v2958, -1.0
        %v3016 = vmax.f32 %v2966, -1.0
        %v3017 = vmax.f32 %v2974, -1.0
        %v3018 = vmax.f32 %v2982, -1.0
        %v3019 = vmax.f32 %v2990, -1.0
        %v3020 = vmax.f32 %v2998, -1.0
        %v3021 = vmax.f32 %v3006, -1.0
        %v3022 = vmax.f32 %v3014, -1.0
        %v3023 = vmin.f32 %v3015, 1.0
        %v3024 = vmin.f32 %v3016, 1.0
        %v3025 = vmin.f32 %v3017, 1.0
        %v3026 = vmin.f32 %v3018, 1.0
        %v3027 = vmin.f32 %v3019, 1.0
        %v3028 = vmin.f32 %v3020, 1.0
        %v3029 = vmin.f32 %v3021, 1.0
        %v3030 = vmin.f32 %v3022, 1.0
        %vm3031 = vcmp.eq.f32.partialorder %v3023, 0.0
        %vm3032 = vcmp.eq.f32.partialorder %v3024, 0.0
        %vm3033 = vcmp.eq.f32.partialorder %v3025, 0.0
        %vm3034 = vcmp.eq.f32.partialorder %v3026, 0.0
        %vm3035 = vcmp.eq.f32.partialorder %v3027, 0.0
        %vm3036 = vcmp.eq.f32.partialorder %v3028, 0.0
        %vm3037 = vcmp.eq.f32.partialorder %v3029, 0.0
        %vm3038 = vcmp.eq.f32.partialorder %v3030, 0.0
        %v3039 = vld [vmem:[%s277] sm:$0xf]
        %v3040 = vunpack.c.l.bf16 %v3039
        %3042 = vst [vmem:[#allocation1] ss:$4 sm:$0xff] %v3040
        %v3043 = vld.sshfl [vmem:[#allocation1] sm:$0xff pattern:$0x73625140]
        %v3044 = vld.sshfl [vmem:[#allocation1 + $0x8] sm:$0xff pattern:$0x73625140]
        %v3045 = vld.sshfl [vmem:[#allocation1 + $0x10] sm:$0xff pattern:$0x73625140]
        %v3046 = vld.sshfl [vmem:[#allocation1 + $0x18] sm:$0xff pattern:$0x73625140]
        %v3047 = vrot.slane %v3043, 1
        %v3048 = vrot.slane %v3044, 1
        %v3049 = vrot.slane %v3045, 1
        %v3050 = vrot.slane %v3046, 1
        %v3059 = vsel %vm3031, %v3043, %v3023
        %v3060 = vsel %vm3032, %v3044, %v3024
        %v3061 = vsel %vm3033, %v3045, %v3025
        %v3062 = vsel %vm3034, %v3046, %v3026
        %v3063 = vsel %vm3035, %v3047, %v3027
        %v3064 = vsel %vm3036, %v3048, %v3028
        %v3065 = vsel %vm3037, %v3049, %v3029
        %v3066 = vsel %vm3038, %v3050, %v3030
        %v3075 = vrot.slane %v3060, 6
        %v3076 = vrot.slane %v3061, 4
        %v3077 = vrot.slane %v3062, 2
        %v3078 = vrot.slane %v3064, 6
        %v3079 = vrot.slane %v3065, 4
        %v3080 = vrot.slane %v3066, 2
        %vm3081 = vcmask 1041408
        %v3082 = vsel %vm3081, %v3059, %v3075
        %vm3083 = vcmask 1045508
        %v3084 = vsel %vm3083, %v3076, %v3077
        %vm3085 = vcmask 1043456
        %v3086 = vsel %vm3085, %v3082, %v3084
        %v3087 = vsel %vm3081, %v3063, %v3078
        %v3088 = vsel %vm3083, %v3079, %v3080
        %v3089 = vsel %vm3085, %v3087, %v3088
        %vm3090 = vcmask 1044484
        %v3091 = vsel %vm3090, %v3086, %v3086
        %vm3092 = vcmask 1046534
        %v3093 = vsel %vm3092, %v3086, %v3091
        %v3094 = vrot.slane %v3089, 7
        %vm3095 = vcmask 1041409
        %v3096 = vsel %vm3095, %v3094, %v3093
        %vm3097 = vcmask 1043459
        %v3098 = vsel %vm3097, %v3094, %v3096
        %vm3099 = vcmask 1045509
        %v3100 = vsel %vm3099, %v3094, %v3098
        %vm3101 = vcmask 1047559
        %v3102 = vsel %vm3101, %v3094, %v3100
        %3104 = vst [vmem:[%s312] sm:$0xff] %v3102
        %s3105 = sand.u32 %s132, 1
        %s3106 = scalar_lea.sflag [#allocation4], %s3105
        %s3107 = sand.u32 %s132, 1
        %s3108 = smul.addr %s3107, 8
        %s3109 = scalar_lea.vmem [#allocation10], %s3108
        // Predicated region
        $region53: #{tpu_custom_call.1} parent=35 // pred_check
          %p3110 = pneg %p142
        $region54: #{tpu_custom_call.1} parent=35 // pred_check_branch
          %3112 = sbr.rel (%p3110) target = $region56
        $region55: #{tpu_custom_call.1} parent=35 // pred_region
          %s3113 = smul.u32 4, %s25
          %3115 = vsyncadd %s3106, 0
          %s3116 = smul.addr %s3113, 2
          %s3117 = scalar_lea.hbm %s4, %s3116
          %s3119 = sshll.u32 %s3109, 4
          %s3120 = int_to_ptr.vmem [resolvable:$true] %s3119
          %s3121 = sshll.u32 %s3117, 4
          %s3122 = int_to_ptr.hbm [resolvable:$true] %s3121
          %3124 = dma.vmem_to_hbm [thread:$0]  %s3120, 128, %s3122, %s3106
        $region56: #{tpu_custom_call.1} parent=35 // pred_fallthru
          _
      $region36: #{tpu_custom_call.1} parent=5 // pred_fallthru
        _
      %p3125 = scmp.le.s32.totalorder 2, %s20
      // Predicated region
      $region57: #{tpu_custom_call.1} parent=5 // pred_check
        %p3126 = pneg %p3125
      $region58: #{tpu_custom_call.1} parent=5 // pred_check_branch
        %3128 = sbr.rel (%p3126) target = $region60
      $region59: #{tpu_custom_call.1} parent=5 // pred_region
        %s3129 = ssub.s32 %s20, 2
        // Predicated region
        $region61: #{tpu_custom_call.1} parent=59 // pred_check
          %p3130 = pneg %p148
        $region62: #{tpu_custom_call.1} parent=59 // pred_check_branch
          %3132 = sbr.rel (%p3130) target = $region64
        $region63: #{tpu_custom_call.1} parent=59 // pred_region
          %s3133 = sand.u32 %s133, 1
          %s3134 = scalar_lea.sflag [#allocation4], %s3133
          %s3135 = sand.u32 %s133, 1
          %s3136 = smul.addr %s3135, 8
          %s3137 = scalar_lea.vmem [#allocation10], %s3136
          %3139 = dma.done %s3134, 128
        $region64: #{tpu_custom_call.1} parent=59 // pred_fallthru
          _
      $region60: #{tpu_custom_call.1} parent=5 // pred_fallthru
        _
    $region6: #{tpu_custom_call.1} parent=1 // loop_footer
      %s24 = sadd.s32 1, %s20
    $region7: #{tpu_custom_call.1} parent=1 // loop_footer_branch
      %19 = sbr.rel target = $region3
    $region8: #{tpu_custom_call.1} parent=1 // loop_exit
      _
    %3140 = vsyncpa [#allocation3], 1
    %s3141 = scalar_lea.sflag [#allocation3], 1
    %3142 = vsyncpa %s3141, 1
    %3143 = vsyncpa [#allocation6], 1
    %s3144 = scalar_lea.sflag [#allocation6], 1
    %3145 = vsyncpa %s3144, 1
    %3146 = vsyncpa [#allocation9], 1
    %s3147 = scalar_lea.sflag [#allocation9], 1
    %3148 = vsyncpa %s3147, 1
    %3149 = vsyncpa [#allocation4], 1
    %s3150 = scalar_lea.sflag [#allocation4], 1
    %3151 = vsyncpa %s3150, 1

</llo_original>
